<compile_context>
chip_gen: v5e
topology: v5e:2x2
jax: 0.10.0
libtpu: 0.0.40
codegen_flags: <defaults>
</compile_context>

<pallas_src>
import functools

import jax
import jax.numpy as jnp
from jax import lax
from jax.experimental import pallas as pl
from jax.experimental.pallas import tpu as pltpu


def _flash_attn_kernel(x_q_ref, x_kv_ref,
                       w_q_ref, w_k_ref, w_v_ref,
                       b_q_ref, b_k_ref, b_v_ref,
                       w_o_ref, b_o_ref,
                       o_ref,
                       q_scr, m_scr, l_scr, acc_scr,
                       *, compute_dtype):
    """Grid = (batch, q-tile, kv-tile); kv is the (sequential) reduction axis.

    x_q_ref  : (1, tq,  H)   x rows for this q-tile
    x_kv_ref : (1, tkv, H)   x rows for this kv-tile
    w_*_ref  : (H, H)        per-projection weights (pre-split, pre-transposed)
    b_*_ref  : (1, H)        per-projection biases
    o_ref    : (1, tq,  H)
    scratch  : q (tq,H compute_dtype), m/l (tq,1 f32), acc (tq,H f32)
    """
    ki = pl.program_id(2)
    nk = pl.num_programs(2)

    @pl.when(ki == 0)
    def _init():
        x_q = x_q_ref[0].astype(compute_dtype)                      # (tq, H)
        h = x_q.shape[-1]
        q = jnp.dot(x_q, w_q_ref[...].astype(compute_dtype),
                    preferred_element_type=jnp.float32) + b_q_ref[...]
        # Fold 1/sqrt(H) into q instead of scaling the (tq, tkv) scores.
        q_scr[...] = (q * (h ** -0.5)).astype(q_scr.dtype)
        m_scr[...] = jnp.full(m_scr.shape, -jnp.inf, m_scr.dtype)
        l_scr[...] = jnp.zeros(l_scr.shape, l_scr.dtype)
        acc_scr[...] = jnp.zeros(acc_scr.shape, acc_scr.dtype)

    # --- K/V projection for this kv-tile (MXU, f32 accumulation) ---
    x_kv = x_kv_ref[0].astype(compute_dtype)                        # (tkv, H)
    k = jnp.dot(x_kv, w_k_ref[...].astype(compute_dtype),
                preferred_element_type=jnp.float32) + b_k_ref[...]
    v = jnp.dot(x_kv, w_v_ref[...].astype(compute_dtype),
                preferred_element_type=jnp.float32) + b_v_ref[...]

    # --- scores = q @ k^T without materializing k.T (contract last dims) ---
    s = lax.dot_general(q_scr[...], k.astype(compute_dtype),
                        dimension_numbers=(((1,), (1,)), ((), ())),
                        preferred_element_type=jnp.float32)         # (tq, tkv)

    # --- online (flash) softmax update ---
    m_prev = m_scr[...]
    m_new = jnp.maximum(m_prev, jnp.max(s, axis=-1, keepdims=True))
    alpha = jnp.exp(m_prev - m_new)                                  # (tq, 1)
    p = jnp.exp(s - m_new)                                           # (tq, tkv)
    l_scr[...] = alpha * l_scr[...] + jnp.sum(p, axis=-1, keepdims=True)
    acc_scr[...] = alpha * acc_scr[...] + jnp.dot(
        p.astype(compute_dtype), v.astype(compute_dtype),
        preferred_element_type=jnp.float32)
    m_scr[...] = m_new

    @pl.when(ki == nk - 1)
    def _finalize():
        inv_l = pl.reciprocal(l_scr[...], approx=True)               # EUP slot
        attn = (acc_scr[...] * inv_l).astype(compute_dtype)          # (tq, H)
        out = jnp.dot(attn, w_o_ref[...].astype(compute_dtype),
                      preferred_element_type=jnp.float32) + b_o_ref[...]
        o_ref[0] = out.astype(o_ref.dtype)


def _pick_tile(s, preferred):
    if s % preferred == 0:
        return preferred
    # TODO(synk): ragged S (not a multiple of the preferred tile) falls back to
    # a single full-sequence tile; a masked / BoundedSlice variant would keep it
    # tiled for large non-multiple sequence lengths.
    return s


def single_head_attention(x, w_qkv, b_qkv, w_out, b_out,
                          *, q_tile=128, kv_tile=256,
                          compute_dtype=jnp.bfloat16):
    """x: (B, S, H); w_qkv: (H, 3H); b_qkv: (3H,); w_out: (H, H); b_out: (H,).

    q_tile/kv_tile: use 128/128 on v5e (4x128^2 MXU), 128-256/256 on v6e/v7x.
    """
    B, S, H = x.shape
    tq = _pick_tile(S, q_tile)
    tkv = _pick_tile(S, kv_tile)
    nq, nk = S // tq, S // tkv

    # Split the fused QKV projection on the host: three (H, H) weights and
    # (1, H) biases. Inside the kernel this avoids slicing a fused (tq, 3H)
    # intermediate (in-kernel value slices are not views).
    w_q = w_qkv[:, 0 * H:1 * H]
    w_k = w_qkv[:, 1 * H:2 * H]
    w_v = w_qkv[:, 2 * H:3 * H]
    b_q = b_qkv[0 * H:1 * H].reshape(1, H)
    b_k = b_qkv[1 * H:2 * H].reshape(1, H)
    b_v = b_qkv[2 * H:3 * H].reshape(1, H)
    b_o = b_out.reshape(1, H)

    kernel = functools.partial(_flash_attn_kernel, compute_dtype=compute_dtype)

    def _w_spec(shape, single_buffer):
        # Grid-invariant operand: constant index_map; single-buffering halves
        # its VMEM footprint (matters on v7x's 64 MiB part at large H).
        if single_buffer:
            return pl.BlockSpec(shape, lambda b, qi, ki: (0, 0),
                                pipeline_mode=pl.Buffered(1))
        return pl.BlockSpec(shape, lambda b, qi, ki: (0, 0))

    def _run(single_buffer_weights):
        grid_spec = pltpu.PrefetchScalarGridSpec(
            num_scalar_prefetch=0,
            grid=(B, nq, nk),
            in_specs=[
                pl.BlockSpec((1, tq, H), lambda b, qi, ki: (b, qi, 0)),   # x (q rows)
                pl.BlockSpec((1, tkv, H), lambda b, qi, ki: (b, ki, 0)),  # x (kv rows)
                _w_spec((H, H), single_buffer_weights),                   # Wq
                _w_spec((H, H), single_buffer_weights),                   # Wk
                _w_spec((H, H), single_buffer_weights),                   # Wv
                _w_spec((1, H), single_buffer_weights),                   # bq
                _w_spec((1, H), single_buffer_weights),                   # bk
                _w_spec((1, H), single_buffer_weights),                   # bv
                _w_spec((H, H), single_buffer_weights),                   # Wout
                _w_spec((1, H), single_buffer_weights),                   # bout
            ],
            out_specs=pl.BlockSpec((1, tq, H), lambda b, qi, ki: (b, qi, 0)),
            scratch_shapes=[
                pltpu.VMEM((tq, H), compute_dtype),    # q (pre-scaled)
                pltpu.VMEM((tq, 1), jnp.float32),      # running max m
                pltpu.VMEM((tq, 1), jnp.float32),      # running denom l
                pltpu.VMEM((tq, H), jnp.float32),      # output accumulator
            ],
        )
        return pl.pallas_call(
            kernel,
            out_shape=jax.ShapeDtypeStruct((B, S, H), x.dtype),
            grid_spec=grid_spec,
            compiler_params=pltpu.CompilerParams(
                dimension_semantics=("parallel", "parallel", "arbitrary"),
                vmem_limit_bytes=32 * 1024 * 1024,
            ),
        )(x, x, w_q, w_k, w_v, b_q, b_k, b_v, w_out, b_o)

    try:
        return _run(True)
    except Exception:
        # Fallback for jax versions where BlockSpec.pipeline_mode isn't
        # supported by the TPU grid pipeliner (double-buffers weights instead).
        return _run(False)


def _xavier_uniform(key, fan_in, fan_out, shape):
    bound = (6.0 / (fan_in + fan_out)) ** 0.5
    return jax.random.uniform(key, shape, jnp.float32, -bound, bound)


def _reference(x, w_qkv, b_qkv, w_out, b_out):
    """Plain-JAX reference of the PyTorch forward (eval mode, f32)."""
    H = x.shape[-1]
    qkv = x @ w_qkv + b_qkv
    q, k, v = qkv[..., :H], qkv[..., H:2 * H], qkv[..., 2 * H:]
    scores = jnp.einsum("bqd,bkd->bqk", q, k) * (H ** -0.5)
    p = jax.nn.softmax(scores, axis=-1)
    attn = jnp.einsum("bqk,bkd->bqd", p, v)
    return attn @ w_out + b_out


if __name__ == "__main__":
    B, S, H = 2, 8, 32
    key = jax.random.PRNGKey(0)
    kx, kw1, kw2 = jax.random.split(key, 3)

    x = jax.random.normal(kx, (B, S, H), dtype=jnp.float32)

    # nn.Linear(hidden, 3*hidden): weight (3H, H) xavier-uniform, bias zeros.
    # Stored transposed as (H, 3H) so the kernel computes x @ W.
    w_qkv = _xavier_uniform(kw1, H, 3 * H, (H, 3 * H))
    b_qkv = jnp.zeros((3 * H,), jnp.float32)
    w_out = _xavier_uniform(kw2, H, H, (H, H))
    b_out = jnp.zeros((H,), jnp.float32)

    ref = _reference(x, w_qkv, b_qkv, w_out, b_out)

    # f32-operand path (tight check; approx reciprocal gives ~1e-3 rel. slack).
    out_f32 = jax.block_until_ready(
        single_head_attention(x, w_qkv, b_qkv, w_out, b_out,
                              compute_dtype=jnp.float32))
    assert out_f32.shape == (B, S, H)
    assert jnp.allclose(out_f32, ref, atol=5e-3, rtol=5e-3), "f32 path mismatch"

    # bf16-operand path (v6e/v7x MXU fast path, f32 accumulation).
    out_bf16 = jax.block_until_ready(
        single_head_attention(x, w_qkv, b_qkv, w_out, b_out,
                              compute_dtype=jnp.bfloat16))
    assert out_bf16.shape == (B, S, H)
    assert jnp.allclose(out_bf16, ref, atol=2e-2, rtol=2e-2), "bf16 path mismatch"

    print("KERNEL_OK")
</pallas_src>

<mosaic_0001>
module attributes {stable_mosaic.version = 11 : i64} {
  func.func @_flash_attn_kernel(%arg0: i32, %arg1: i32, %arg2: i32, %arg3: memref<1x8x32xf32, #tpu.memory_space<vmem>>, %arg4: memref<1x8x32xf32, #tpu.memory_space<vmem>>, %arg5: memref<32x32xf32, #tpu.memory_space<vmem>>, %arg6: memref<32x32xf32, #tpu.memory_space<vmem>>, %arg7: memref<32x32xf32, #tpu.memory_space<vmem>>, %arg8: memref<1x32xf32, #tpu.memory_space<vmem>>, %arg9: memref<1x32xf32, #tpu.memory_space<vmem>>, %arg10: memref<1x32xf32, #tpu.memory_space<vmem>>, %arg11: memref<32x32xf32, #tpu.memory_space<vmem>>, %arg12: memref<1x32xf32, #tpu.memory_space<vmem>>, %arg13: memref<1x8x32xf32, #tpu.memory_space<vmem>>, %arg14: memref<8x32xf32, #tpu.memory_space<vmem>>, %arg15: memref<8x1xf32, #tpu.memory_space<vmem>>, %arg16: memref<8x1xf32, #tpu.memory_space<vmem>>, %arg17: memref<8x32xf32, #tpu.memory_space<vmem>>) attributes {dimension_semantics = [#tpu.dimension_semantics<parallel>, #tpu.dimension_semantics<parallel>, #tpu.dimension_semantics<arbitrary>], iteration_bounds = array<i64: 2, 1, 1>, scalar_prefetch = 0 : i64, scratch_operands = 4 : i64, tpu.core_type = #tpu.core_type<tc>, window_params = [{transform_indices = @transform_0, window_bounds = array<i64: 1, 8, 32>}, {transform_indices = @transform_1, window_bounds = array<i64: 1, 8, 32>}, {pipeline_mode = #tpu.pipeline_mode<synchronous>, transform_indices = @transform_2, window_bounds = array<i64: 32, 32>}, {pipeline_mode = #tpu.pipeline_mode<synchronous>, transform_indices = @transform_3, window_bounds = array<i64: 32, 32>}, {pipeline_mode = #tpu.pipeline_mode<synchronous>, transform_indices = @transform_4, window_bounds = array<i64: 32, 32>}, {pipeline_mode = #tpu.pipeline_mode<synchronous>, transform_indices = @transform_5, window_bounds = array<i64: 1, 32>}, {pipeline_mode = #tpu.pipeline_mode<synchronous>, transform_indices = @transform_6, window_bounds = array<i64: 1, 32>}, {pipeline_mode = #tpu.pipeline_mode<synchronous>, transform_indices = @transform_7, window_bounds = array<i64: 1, 32>}, {pipeline_mode = #tpu.pipeline_mode<synchronous>, transform_indices = @transform_8, window_bounds = array<i64: 32, 32>}, {pipeline_mode = #tpu.pipeline_mode<synchronous>, transform_indices = @transform_9, window_bounds = array<i64: 1, 32>}, {transform_indices = @transform_10, window_bounds = array<i64: 1, 8, 32>}]} {
    %c0_i32 = arith.constant 0 : i32
    %0 = arith.cmpi eq, %arg2, %c0_i32 : i32
    %1 = arith.extui %0 : i1 to i32
    %c0_i32_0 = arith.constant 0 : i32
    %2 = arith.cmpi ne, %1, %c0_i32_0 : i32
    scf.if %2 {
      %c0_32 = arith.constant 0 : index
      %c0_33 = arith.constant 0 : index
      %c0_34 = arith.constant 0 : index
      %42 = vector.load %arg3[%c0_32, %c0_33, %c0_34] : memref<1x8x32xf32, #tpu.memory_space<vmem>>, vector<1x8x32xf32>
      %43 = vector.shape_cast %42 : vector<1x8x32xf32> to vector<8x32xf32>
      %c0_35 = arith.constant 0 : index
      %c0_36 = arith.constant 0 : index
      %44 = vector.load %arg5[%c0_35, %c0_36] : memref<32x32xf32, #tpu.memory_space<vmem>>, vector<32x32xf32>
      %cst_37 = arith.constant dense<0.000000e+00> : vector<8x32xf32>
      %45 = tpu.matmul %43, %44, %cst_37 {dimension_numbers = #tpu.dot_dimension_numbers<[1], [0], [0], [1], [0, 0, 1, 1], [], []>} : vector<8x32xf32>, vector<32x32xf32>, vector<8x32xf32> -> vector<8x32xf32>
      %c0_38 = arith.constant 0 : index
      %c0_39 = arith.constant 0 : index
      %46 = vector.load %arg8[%c0_38, %c0_39] : memref<1x32xf32, #tpu.memory_space<vmem>>, vector<1x32xf32>
      %47 = vector.broadcast %46 : vector<1x32xf32> to vector<8x32xf32>
      %48 = arith.addf %45, %47 : vector<8x32xf32>
      %cst_40 = arith.constant 0.176776692 : f32
      %49 = vector.broadcast %cst_40 : f32 to vector<8x32xf32>
      %50 = arith.mulf %48, %49 : vector<8x32xf32>
      %c0_41 = arith.constant 0 : index
      %c0_42 = arith.constant 0 : index
      %51 = vector.load %arg14[%c0_41, %c0_42] : memref<8x32xf32, #tpu.memory_space<vmem>>, vector<8x32xf32>
      tpu.vector_store %arg14[%c0_41, %c0_42], %50 {strides = array<i32>} : memref<8x32xf32, #tpu.memory_space<vmem>>, vector<8x32xf32>,
      %cst_43 = arith.constant 0xFF800000 : f32
      %52 = vector.broadcast %cst_43 : f32 to vector<8x1xf32>
      %c0_44 = arith.constant 0 : index
      %c0_45 = arith.constant 0 : index
      %53 = vector.load %arg15[%c0_44, %c0_45] : memref<8x1xf32, #tpu.memory_space<vmem>>, vector<8x1xf32>
      tpu.vector_store %arg15[%c0_44, %c0_45], %52 {strides = array<i32>} : memref<8x1xf32, #tpu.memory_space<vmem>>, vector<8x1xf32>,
      %cst_46 = arith.constant 0.000000e+00 : f32
      %54 = vector.broadcast %cst_46 : f32 to vector<8x1xf32>
      %c0_47 = arith.constant 0 : index
      %c0_48 = arith.constant 0 : index
      %55 = vector.load %arg16[%c0_47, %c0_48] : memref<8x1xf32, #tpu.memory_space<vmem>>, vector<8x1xf32>
      tpu.vector_store %arg16[%c0_47, %c0_48], %54 {strides = array<i32>} : memref<8x1xf32, #tpu.memory_space<vmem>>, vector<8x1xf32>,
      %cst_49 = arith.constant 0.000000e+00 : f32
      %56 = vector.broadcast %cst_49 : f32 to vector<8x32xf32>
      %c0_50 = arith.constant 0 : index
      %c0_51 = arith.constant 0 : index
      %57 = vector.load %arg17[%c0_50, %c0_51] : memref<8x32xf32, #tpu.memory_space<vmem>>, vector<8x32xf32>
      tpu.vector_store %arg17[%c0_50, %c0_51], %56 {strides = array<i32>} : memref<8x32xf32, #tpu.memory_space<vmem>>, vector<8x32xf32>,
    } else {
    }
    %c0 = arith.constant 0 : index
    %c0_1 = arith.constant 0 : index
    %c0_2 = arith.constant 0 : index
    %3 = vector.load %arg4[%c0, %c0_1, %c0_2] : memref<1x8x32xf32, #tpu.memory_space<vmem>>, vector<1x8x32xf32>
    %4 = vector.shape_cast %3 : vector<1x8x32xf32> to vector<8x32xf32>
    %c0_3 = arith.constant 0 : index
    %c0_4 = arith.constant 0 : index
    %5 = vector.load %arg6[%c0_3, %c0_4] : memref<32x32xf32, #tpu.memory_space<vmem>>, vector<32x32xf32>
    %cst = arith.constant dense<0.000000e+00> : vector<8x32xf32>
    %6 = tpu.matmul %4, %5, %cst {dimension_numbers = #tpu.dot_dimension_numbers<[1], [0], [0], [1], [0, 0, 1, 1], [], []>} : vector<8x32xf32>, vector<32x32xf32>, vector<8x32xf32> -> vector<8x32xf32>
    %c0_5 = arith.constant 0 : index
    %c0_6 = arith.constant 0 : index
    %7 = vector.load %arg9[%c0_5, %c0_6] : memref<1x32xf32, #tpu.memory_space<vmem>>, vector<1x32xf32>
    %8 = vector.broadcast %7 : vector<1x32xf32> to vector<8x32xf32>
    %9 = arith.addf %6, %8 : vector<8x32xf32>
    %c0_7 = arith.constant 0 : index
    %c0_8 = arith.constant 0 : index
    %10 = vector.load %arg7[%c0_7, %c0_8] : memref<32x32xf32, #tpu.memory_space<vmem>>, vector<32x32xf32>
    %cst_9 = arith.constant dense<0.000000e+00> : vector<8x32xf32>
    %11 = tpu.matmul %4, %10, %cst_9 {dimension_numbers = #tpu.dot_dimension_numbers<[1], [0], [0], [1], [0, 0, 1, 1], [], []>} : vector<8x32xf32>, vector<32x32xf32>, vector<8x32xf32> -> vector<8x32xf32>
    %c0_10 = arith.constant 0 : index
    %c0_11 = arith.constant 0 : index
    %12 = vector.load %arg10[%c0_10, %c0_11] : memref<1x32xf32, #tpu.memory_space<vmem>>, vector<1x32xf32>
    %13 = vector.broadcast %12 : vector<1x32xf32> to vector<8x32xf32>
    %14 = arith.addf %11, %13 : vector<8x32xf32>
    %c0_12 = arith.constant 0 : index
    %c0_13 = arith.constant 0 : index
    %15 = vector.load %arg14[%c0_12, %c0_13] : memref<8x32xf32, #tpu.memory_space<vmem>>, vector<8x32xf32>
    %cst_14 = arith.constant dense<0.000000e+00> : vector<8x8xf32>
    %16 = tpu.matmul %15, %9, %cst_14 {dimension_numbers = #tpu.dot_dimension_numbers<[1], [1], [0], [0], [0, 0, 1, 0], [], []>} : vector<8x32xf32>, vector<8x32xf32>, vector<8x8xf32> -> vector<8x8xf32>
    %c0_15 = arith.constant 0 : index
    %c0_16 = arith.constant 0 : index
    %17 = vector.load %arg15[%c0_15, %c0_16] : memref<8x1xf32, #tpu.memory_space<vmem>>, vector<8x1xf32>
    %cst_17 = arith.constant dense<0xFF800000> : vector<8xf32>
    %18 = vector.multi_reduction <maximumf>, %16, %cst_17 [1] : vector<8x8xf32> to vector<8xf32>
    %19 = vector.shape_cast %18 : vector<8xf32> to vector<8x1xf32>
    %20 = arith.maximumf %17, %19 : vector<8x1xf32>
    %21 = arith.subf %17, %20 : vector<8x1xf32>
    %22 = math.exp %21 : vector<8x1xf32>
    %23 = vector.broadcast %20 : vector<8x1xf32> to vector<8x8xf32>
    %24 = arith.subf %16, %23 : vector<8x8xf32>
    %25 = math.exp %24 : vector<8x8xf32>
    %c0_18 = arith.constant 0 : index
    %c0_19 = arith.constant 0 : index
    %26 = vector.load %arg16[%c0_18, %c0_19] : memref<8x1xf32, #tpu.memory_space<vmem>>, vector<8x1xf32>
    %27 = arith.mulf %22, %26 : vector<8x1xf32>
    %cst_20 = arith.constant dense<0.000000e+00> : vector<8xf32>
    %28 = vector.multi_reduction <add>, %25, %cst_20 [1] : vector<8x8xf32> to vector<8xf32>
    %29 = vector.shape_cast %28 : vector<8xf32> to vector<8x1xf32>
    %30 = arith.addf %27, %29 : vector<8x1xf32>
    %c0_21 = arith.constant 0 : index
    %c0_22 = arith.constant 0 : index
    %31 = vector.load %arg16[%c0_21, %c0_22] : memref<8x1xf32, #tpu.memory_space<vmem>>, vector<8x1xf32>
    tpu.vector_store %arg16[%c0_21, %c0_22], %30 {strides = array<i32>} : memref<8x1xf32, #tpu.memory_space<vmem>>, vector<8x1xf32>,
    %c0_23 = arith.constant 0 : index
    %c0_24 = arith.constant 0 : index
    %32 = vector.load %arg17[%c0_23, %c0_24] : memref<8x32xf32, #tpu.memory_space<vmem>>, vector<8x32xf32>
    %33 = vector.broadcast %22 : vector<8x1xf32> to vector<8x32xf32>
    %34 = arith.mulf %33, %32 : vector<8x32xf32>
    %cst_25 = arith.constant dense<0.000000e+00> : vector<8x32xf32>
    %35 = tpu.matmul %25, %14, %cst_25 {dimension_numbers = #tpu.dot_dimension_numbers<[1], [0], [0], [1], [0, 0, 1, 1], [], []>} : vector<8x8xf32>, vector<8x32xf32>, vector<8x32xf32> -> vector<8x32xf32>
    %36 = arith.addf %34, %35 : vector<8x32xf32>
    %c0_26 = arith.constant 0 : index
    %c0_27 = arith.constant 0 : index
    %37 = vector.load %arg17[%c0_26, %c0_27] : memref<8x32xf32, #tpu.memory_space<vmem>>, vector<8x32xf32>
    tpu.vector_store %arg17[%c0_26, %c0_27], %36 {strides = array<i32>} : memref<8x32xf32, #tpu.memory_space<vmem>>, vector<8x32xf32>,
    %c0_28 = arith.constant 0 : index
    %c0_29 = arith.constant 0 : index
    %38 = vector.load %arg15[%c0_28, %c0_29] : memref<8x1xf32, #tpu.memory_space<vmem>>, vector<8x1xf32>
    tpu.vector_store %arg15[%c0_28, %c0_29], %20 {strides = array<i32>} : memref<8x1xf32, #tpu.memory_space<vmem>>, vector<8x1xf32>,
    %c0_i32_30 = arith.constant 0 : i32
    %39 = arith.cmpi eq, %arg2, %c0_i32_30 : i32
    %40 = arith.extui %39 : i1 to i32
    %c0_i32_31 = arith.constant 0 : i32
    %41 = arith.cmpi ne, %40, %c0_i32_31 : i32
    scf.if %41 {
      %c0_32 = arith.constant 0 : index
      %c0_33 = arith.constant 0 : index
      %42 = vector.load %arg16[%c0_32, %c0_33] : memref<8x1xf32, #tpu.memory_space<vmem>>, vector<8x1xf32>
      %43 = tpu.reciprocal %42 {approx = true} : vector<8x1xf32> -> vector<8x1xf32>
      %c0_34 = arith.constant 0 : index
      %c0_35 = arith.constant 0 : index
      %44 = vector.load %arg17[%c0_34, %c0_35] : memref<8x32xf32, #tpu.memory_space<vmem>>, vector<8x32xf32>
      %45 = vector.broadcast %43 : vector<8x1xf32> to vector<8x32xf32>
      %46 = arith.mulf %44, %45 : vector<8x32xf32>
      %c0_36 = arith.constant 0 : index
      %c0_37 = arith.constant 0 : index
      %47 = vector.load %arg11[%c0_36, %c0_37] : memref<32x32xf32, #tpu.memory_space<vmem>>, vector<32x32xf32>
      %cst_38 = arith.constant dense<0.000000e+00> : vector<8x32xf32>
      %48 = tpu.matmul %46, %47, %cst_38 {dimension_numbers = #tpu.dot_dimension_numbers<[1], [0], [0], [1], [0, 0, 1, 1], [], []>} : vector<8x32xf32>, vector<32x32xf32>, vector<8x32xf32> -> vector<8x32xf32>
      %c0_39 = arith.constant 0 : index
      %c0_40 = arith.constant 0 : index
      %49 = vector.load %arg12[%c0_39, %c0_40] : memref<1x32xf32, #tpu.memory_space<vmem>>, vector<1x32xf32>
      %50 = vector.broadcast %49 : vector<1x32xf32> to vector<8x32xf32>
      %51 = arith.addf %48, %50 : vector<8x32xf32>
      %c0_41 = arith.constant 0 : index
      %c0_42 = arith.constant 0 : index
      %c0_43 = arith.constant 0 : index
      %52 = vector.load %arg13[%c0_41, %c0_42, %c0_43] : memref<1x8x32xf32, #tpu.memory_space<vmem>>, vector<1x8x32xf32>
      %53 = vector.shape_cast %52 : vector<1x8x32xf32> to vector<8x32xf32>
      %54 = vector.shape_cast %51 : vector<8x32xf32> to vector<1x8x32xf32>
      tpu.vector_store %arg13[%c0_41, %c0_42, %c0_43], %54 {strides = array<i32>} : memref<1x8x32xf32, #tpu.memory_space<vmem>>, vector<1x8x32xf32>,
    } else {
    }
    return
  }
  func.func @transform_0(%arg0: i32, %arg1: i32, %arg2: i32) -> (i32, i32, i32) {
    %c0_i32 = arith.constant 0 : i32
    %c0_i32_0 = arith.constant 0 : i32
    return %arg0, %arg1, %c0_i32 : i32, i32, i32
  }
  func.func @transform_1(%arg0: i32, %arg1: i32, %arg2: i32) -> (i32, i32, i32) {
    %c0_i32 = arith.constant 0 : i32
    %c0_i32_0 = arith.constant 0 : i32
    return %arg0, %arg2, %c0_i32 : i32, i32, i32
  }
  func.func @transform_2(%arg0: i32, %arg1: i32, %arg2: i32) -> (i32, i32) {
    %c0_i32 = arith.constant 0 : i32
    %c0_i32_0 = arith.constant 0 : i32
    %c0_i32_1 = arith.constant 0 : i32
    return %c0_i32, %c0_i32_0 : i32, i32
  }
  func.func @transform_3(%arg0: i32, %arg1: i32, %arg2: i32) -> (i32, i32) {
    %c0_i32 = arith.constant 0 : i32
    %c0_i32_0 = arith.constant 0 : i32
    %c0_i32_1 = arith.constant 0 : i32
    return %c0_i32, %c0_i32_0 : i32, i32
  }
  func.func @transform_4(%arg0: i32, %arg1: i32, %arg2: i32) -> (i32, i32) {
    %c0_i32 = arith.constant 0 : i32
    %c0_i32_0 = arith.constant 0 : i32
    %c0_i32_1 = arith.constant 0 : i32
    return %c0_i32, %c0_i32_0 : i32, i32
  }
  func.func @transform_5(%arg0: i32, %arg1: i32, %arg2: i32) -> (i32, i32) {
    %c0_i32 = arith.constant 0 : i32
    %c0_i32_0 = arith.constant 0 : i32
    %c0_i32_1 = arith.constant 0 : i32
    return %c0_i32, %c0_i32_0 : i32, i32
  }
  func.func @transform_6(%arg0: i32, %arg1: i32, %arg2: i32) -> (i32, i32) {
    %c0_i32 = arith.constant 0 : i32
    %c0_i32_0 = arith.constant 0 : i32
    %c0_i32_1 = arith.constant 0 : i32
    return %c0_i32, %c0_i32_0 : i32, i32
  }
  func.func @transform_7(%arg0: i32, %arg1: i32, %arg2: i32) -> (i32, i32) {
    %c0_i32 = arith.constant 0 : i32
    %c0_i32_0 = arith.constant 0 : i32
    %c0_i32_1 = arith.constant 0 : i32
    return %c0_i32, %c0_i32_0 : i32, i32
  }
  func.func @transform_8(%arg0: i32, %arg1: i32, %arg2: i32) -> (i32, i32) {
    %c0_i32 = arith.constant 0 : i32
    %c0_i32_0 = arith.constant 0 : i32
    %c0_i32_1 = arith.constant 0 : i32
    return %c0_i32, %c0_i32_0 : i32, i32
  }
  func.func @transform_9(%arg0: i32, %arg1: i32, %arg2: i32) -> (i32, i32) {
    %c0_i32 = arith.constant 0 : i32
    %c0_i32_0 = arith.constant 0 : i32
    %c0_i32_1 = arith.constant 0 : i32
    return %c0_i32, %c0_i32_0 : i32, i32
  }
  func.func @transform_10(%arg0: i32, %arg1: i32, %arg2: i32) -> (i32, i32, i32) {
    %c0_i32 = arith.constant 0 : i32
    %c0_i32_0 = arith.constant 0 : i32
    return %arg0, %arg1, %c0_i32 : i32, i32, i32
  }
}

module attributes {stable_mosaic.version = 11 : i64} {
  func.func @_flash_attn_kernel(%arg0: i32, %arg1: i32, %arg2: i32, %arg3: memref<1x8x32xf32, #tpu.memory_space<vmem>>, %arg4: memref<1x8x32xf32, #tpu.memory_space<vmem>>, %arg5: memref<32x32xf32, #tpu.memory_space<vmem>>, %arg6: memref<32x32xf32, #tpu.memory_space<vmem>>, %arg7: memref<32x32xf32, #tpu.memory_space<vmem>>, %arg8: memref<1x32xf32, #tpu.memory_space<vmem>>, %arg9: memref<1x32xf32, #tpu.memory_space<vmem>>, %arg10: memref<1x32xf32, #tpu.memory_space<vmem>>, %arg11: memref<32x32xf32, #tpu.memory_space<vmem>>, %arg12: memref<1x32xf32, #tpu.memory_space<vmem>>, %arg13: memref<1x8x32xf32, #tpu.memory_space<vmem>>, %arg14: memref<8x32xf32, #tpu.memory_space<vmem>>, %arg15: memref<8x1xf32, #tpu.memory_space<vmem>>, %arg16: memref<8x1xf32, #tpu.memory_space<vmem>>, %arg17: memref<8x32xf32, #tpu.memory_space<vmem>>) attributes {dimension_semantics = [#tpu.dimension_semantics<parallel>, #tpu.dimension_semantics<parallel>, #tpu.dimension_semantics<arbitrary>], iteration_bounds = array<i64: 2, 1, 1>, scalar_prefetch = 0 : i64, scratch_operands = 4 : i64, tpu.core_type = #tpu.core_type<tc>, window_params = [{transform_indices = @transform_0, window_bounds = array<i64: 1, 8, 32>}, {transform_indices = @transform_1, window_bounds = array<i64: 1, 8, 32>}, {pipeline_mode = #tpu.pipeline_mode<synchronous>, transform_indices = @transform_2, window_bounds = array<i64: 32, 32>}, {pipeline_mode = #tpu.pipeline_mode<synchronous>, transform_indices = @transform_3, window_bounds = array<i64: 32, 32>}, {pipeline_mode = #tpu.pipeline_mode<synchronous>, transform_indices = @transform_4, window_bounds = array<i64: 32, 32>}, {pipeline_mode = #tpu.pipeline_mode<synchronous>, transform_indices = @transform_5, window_bounds = array<i64: 1, 32>}, {pipeline_mode = #tpu.pipeline_mode<synchronous>, transform_indices = @transform_6, window_bounds = array<i64: 1, 32>}, {pipeline_mode = #tpu.pipeline_mode<synchronous>, transform_indices = @transform_7, window_bounds = array<i64: 1, 32>}, {pipeline_mode = #tpu.pipeline_mode<synchronous>, transform_indices = @transform_8, window_bounds = array<i64: 32, 32>}, {pipeline_mode = #tpu.pipeline_mode<synchronous>, transform_indices = @transform_9, window_bounds = array<i64: 1, 32>}, {transform_indices = @transform_10, window_bounds = array<i64: 1, 8, 32>}]} {
    %c0_i32 = arith.constant 0 : i32
    %0 = arith.cmpi eq, %arg2, %c0_i32 : i32
    %1 = arith.extui %0 : i1 to i32
    %c0_i32_0 = arith.constant 0 : i32
    %2 = arith.cmpi ne, %1, %c0_i32_0 : i32
    scf.if %2 {
      %c0_32 = arith.constant 0 : index
      %c0_33 = arith.constant 0 : index
      %c0_34 = arith.constant 0 : index
      %42 = vector.load %arg3[%c0_32, %c0_33, %c0_34] : memref<1x8x32xf32, #tpu.memory_space<vmem>>, vector<1x8x32xf32>
      %43 = vector.shape_cast %42 : vector<1x8x32xf32> to vector<8x32xf32>
      %c0_35 = arith.constant 0 : index
      %c0_36 = arith.constant 0 : index
      %44 = vector.load %arg5[%c0_35, %c0_36] : memref<32x32xf32, #tpu.memory_space<vmem>>, vector<32x32xf32>
      %cst_37 = arith.constant dense<0.000000e+00> : vector<8x32xf32>
      %45 = tpu.matmul %43, %44, %cst_37 {dimension_numbers = #tpu.dot_dimension_numbers<[1], [0], [0], [1], [0, 0, 1, 1], [], []>} : vector<8x32xf32>, vector<32x32xf32>, vector<8x32xf32> -> vector<8x32xf32>
      %c0_38 = arith.constant 0 : index
      %c0_39 = arith.constant 0 : index
      %46 = vector.load %arg8[%c0_38, %c0_39] : memref<1x32xf32, #tpu.memory_space<vmem>>, vector<1x32xf32>
      %47 = vector.broadcast %46 : vector<1x32xf32> to vector<8x32xf32>
      %48 = arith.addf %45, %47 : vector<8x32xf32>
      %cst_40 = arith.constant 0.176776692 : f32
      %49 = vector.broadcast %cst_40 : f32 to vector<8x32xf32>
      %50 = arith.mulf %48, %49 : vector<8x32xf32>
      %c0_41 = arith.constant 0 : index
      %c0_42 = arith.constant 0 : index
      %51 = vector.load %arg14[%c0_41, %c0_42] : memref<8x32xf32, #tpu.memory_space<vmem>>, vector<8x32xf32>
      tpu.vector_store %arg14[%c0_41, %c0_42], %50 {strides = array<i32>} : memref<8x32xf32, #tpu.memory_space<vmem>>, vector<8x32xf32>,
      %cst_43 = arith.constant 0xFF800000 : f32
      %52 = vector.broadcast %cst_43 : f32 to vector<8x1xf32>
      %c0_44 = arith.constant 0 : index
      %c0_45 = arith.constant 0 : index
      %53 = vector.load %arg15[%c0_44, %c0_45] : memref<8x1xf32, #tpu.memory_space<vmem>>, vector<8x1xf32>
      tpu.vector_store %arg15[%c0_44, %c0_45], %52 {strides = array<i32>} : memref<8x1xf32, #tpu.memory_space<vmem>>, vector<8x1xf32>,
      %cst_46 = arith.constant 0.000000e+00 : f32
      %54 = vector.broadcast %cst_46 : f32 to vector<8x1xf32>
      %c0_47 = arith.constant 0 : index
      %c0_48 = arith.constant 0 : index
      %55 = vector.load %arg16[%c0_47, %c0_48] : memref<8x1xf32, #tpu.memory_space<vmem>>, vector<8x1xf32>
      tpu.vector_store %arg16[%c0_47, %c0_48], %54 {strides = array<i32>} : memref<8x1xf32, #tpu.memory_space<vmem>>, vector<8x1xf32>,
      %cst_49 = arith.constant 0.000000e+00 : f32
      %56 = vector.broadcast %cst_49 : f32 to vector<8x32xf32>
      %c0_50 = arith.constant 0 : index
      %c0_51 = arith.constant 0 : index
      %57 = vector.load %arg17[%c0_50, %c0_51] : memref<8x32xf32, #tpu.memory_space<vmem>>, vector<8x32xf32>
      tpu.vector_store %arg17[%c0_50, %c0_51], %56 {strides = array<i32>} : memref<8x32xf32, #tpu.memory_space<vmem>>, vector<8x32xf32>,
    } else {
    }
    %c0 = arith.constant 0 : index
    %c0_1 = arith.constant 0 : index
    %c0_2 = arith.constant 0 : index
    %3 = vector.load %arg4[%c0, %c0_1, %c0_2] : memref<1x8x32xf32, #tpu.memory_space<vmem>>, vector<1x8x32xf32>
    %4 = vector.shape_cast %3 : vector<1x8x32xf32> to vector<8x32xf32>
    %c0_3 = arith.constant 0 : index
    %c0_4 = arith.constant 0 : index
    %5 = vector.load %arg6[%c0_3, %c0_4] : memref<32x32xf32, #tpu.memory_space<vmem>>, vector<32x32xf32>
    %cst = arith.constant dense<0.000000e+00> : vector<8x32xf32>
    %6 = tpu.matmul %4, %5, %cst {dimension_numbers = #tpu.dot_dimension_numbers<[1], [0], [0], [1], [0, 0, 1, 1], [], []>} : vector<8x32xf32>, vector<32x32xf32>, vector<8x32xf32> -> vector<8x32xf32>
    %c0_5 = arith.constant 0 : index
    %c0_6 = arith.constant 0 : index
    %7 = vector.load %arg9[%c0_5, %c0_6] : memref<1x32xf32, #tpu.memory_space<vmem>>, vector<1x32xf32>
    %8 = vector.broadcast %7 : vector<1x32xf32> to vector<8x32xf32>
    %9 = arith.addf %6, %8 : vector<8x32xf32>
    %c0_7 = arith.constant 0 : index
    %c0_8 = arith.constant 0 : index
    %10 = vector.load %arg7[%c0_7, %c0_8] : memref<32x32xf32, #tpu.memory_space<vmem>>, vector<32x32xf32>
    %cst_9 = arith.constant dense<0.000000e+00> : vector<8x32xf32>
    %11 = tpu.matmul %4, %10, %cst_9 {dimension_numbers = #tpu.dot_dimension_numbers<[1], [0], [0], [1], [0, 0, 1, 1], [], []>} : vector<8x32xf32>, vector<32x32xf32>, vector<8x32xf32> -> vector<8x32xf32>
    %c0_10 = arith.constant 0 : index
    %c0_11 = arith.constant 0 : index
    %12 = vector.load %arg10[%c0_10, %c0_11] : memref<1x32xf32, #tpu.memory_space<vmem>>, vector<1x32xf32>
    %13 = vector.broadcast %12 : vector<1x32xf32> to vector<8x32xf32>
    %14 = arith.addf %11, %13 : vector<8x32xf32>
    %c0_12 = arith.constant 0 : index
    %c0_13 = arith.constant 0 : index
    %15 = vector.load %arg14[%c0_12, %c0_13] : memref<8x32xf32, #tpu.memory_space<vmem>>, vector<8x32xf32>
    %cst_14 = arith.constant dense<0.000000e+00> : vector<8x8xf32>
    %16 = tpu.matmul %15, %9, %cst_14 {dimension_numbers = #tpu.dot_dimension_numbers<[1], [1], [0], [0], [0, 0, 1, 0], [], []>} : vector<8x32xf32>, vector<8x32xf32>, vector<8x8xf32> -> vector<8x8xf32>
    %c0_15 = arith.constant 0 : index
    %c0_16 = arith.constant 0 : index
    %17 = vector.load %arg15[%c0_15, %c0_16] : memref<8x1xf32, #tpu.memory_space<vmem>>, vector<8x1xf32>
    %cst_17 = arith.constant dense<0xFF800000> : vector<8xf32>
    %18 = vector.multi_reduction <maximumf>, %16, %cst_17 [1] : vector<8x8xf32> to vector<8xf32>
    %19 = vector.shape_cast %18 : vector<8xf32> to vector<8x1xf32>
    %20 = arith.maximumf %17, %19 : vector<8x1xf32>
    %21 = arith.subf %17, %20 : vector<8x1xf32>
    %22 = math.exp %21 : vector<8x1xf32>
    %23 = vector.broadcast %20 : vector<8x1xf32> to vector<8x8xf32>
    %24 = arith.subf %16, %23 : vector<8x8xf32>
    %25 = math.exp %24 : vector<8x8xf32>
    %c0_18 = arith.constant 0 : index
    %c0_19 = arith.constant 0 : index
    %26 = vector.load %arg16[%c0_18, %c0_19] : memref<8x1xf32, #tpu.memory_space<vmem>>, vector<8x1xf32>
    %27 = arith.mulf %22, %26 : vector<8x1xf32>
    %cst_20 = arith.constant dense<0.000000e+00> : vector<8xf32>
    %28 = vector.multi_reduction <add>, %25, %cst_20 [1] : vector<8x8xf32> to vector<8xf32>
    %29 = vector.shape_cast %28 : vector<8xf32> to vector<8x1xf32>
    %30 = arith.addf %27, %29 : vector<8x1xf32>
    %c0_21 = arith.constant 0 : index
    %c0_22 = arith.constant 0 : index
    %31 = vector.load %arg16[%c0_21, %c0_22] : memref<8x1xf32, #tpu.memory_space<vmem>>, vector<8x1xf32>
    tpu.vector_store %arg16[%c0_21, %c0_22], %30 {strides = array<i32>} : memref<8x1xf32, #tpu.memory_space<vmem>>, vector<8x1xf32>,
    %c0_23 = arith.constant 0 : index
    %c0_24 = arith.constant 0 : index
    %32 = vector.load %arg17[%c0_23, %c0_24] : memref<8x32xf32, #tpu.memory_space<vmem>>, vector<8x32xf32>
    %33 = vector.broadcast %22 : vector<8x1xf32> to vector<8x32xf32>
    %34 = arith.mulf %33, %32 : vector<8x32xf32>
    %cst_25 = arith.constant dense<0.000000e+00> : vector<8x32xf32>
    %35 = tpu.matmul %25, %14, %cst_25 {dimension_numbers = #tpu.dot_dimension_numbers<[1], [0], [0], [1], [0, 0, 1, 1], [], []>} : vector<8x8xf32>, vector<8x32xf32>, vector<8x32xf32> -> vector<8x32xf32>
    %36 = arith.addf %34, %35 : vector<8x32xf32>
    %c0_26 = arith.constant 0 : index
    %c0_27 = arith.constant 0 : index
    %37 = vector.load %arg17[%c0_26, %c0_27] : memref<8x32xf32, #tpu.memory_space<vmem>>, vector<8x32xf32>
    tpu.vector_store %arg17[%c0_26, %c0_27], %36 {strides = array<i32>} : memref<8x32xf32, #tpu.memory_space<vmem>>, vector<8x32xf32>,
    %c0_28 = arith.constant 0 : index
    %c0_29 = arith.constant 0 : index
    %38 = vector.load %arg15[%c0_28, %c0_29] : memref<8x1xf32, #tpu.memory_space<vmem>>, vector<8x1xf32>
    tpu.vector_store %arg15[%c0_28, %c0_29], %20 {strides = array<i32>} : memref<8x1xf32, #tpu.memory_space<vmem>>, vector<8x1xf32>,
    %c0_i32_30 = arith.constant 0 : i32
    %39 = arith.cmpi eq, %arg2, %c0_i32_30 : i32
    %40 = arith.extui %39 : i1 to i32
    %c0_i32_31 = arith.constant 0 : i32
    %41 = arith.cmpi ne, %40, %c0_i32_31 : i32
    scf.if %41 {
      %c0_32 = arith.constant 0 : index
      %c0_33 = arith.constant 0 : index
      %42 = vector.load %arg16[%c0_32, %c0_33] : memref<8x1xf32, #tpu.memory_space<vmem>>, vector<8x1xf32>
      %43 = tpu.reciprocal %42 {approx = true} : vector<8x1xf32> -> vector<8x1xf32>
      %c0_34 = arith.constant 0 : index
      %c0_35 = arith.constant 0 : index
      %44 = vector.load %arg17[%c0_34, %c0_35] : memref<8x32xf32, #tpu.memory_space<vmem>>, vector<8x32xf32>
      %45 = vector.broadcast %43 : vector<8x1xf32> to vector<8x32xf32>
      %46 = arith.mulf %44, %45 : vector<8x32xf32>
      %c0_36 = arith.constant 0 : index
      %c0_37 = arith.constant 0 : index
      %47 = vector.load %arg11[%c0_36, %c0_37] : memref<32x32xf32, #tpu.memory_space<vmem>>, vector<32x32xf32>
      %cst_38 = arith.constant dense<0.000000e+00> : vector<8x32xf32>
      %48 = tpu.matmul %46, %47, %cst_38 {dimension_numbers = #tpu.dot_dimension_numbers<[1], [0], [0], [1], [0, 0, 1, 1], [], []>} : vector<8x32xf32>, vector<32x32xf32>, vector<8x32xf32> -> vector<8x32xf32>
      %c0_39 = arith.constant 0 : index
      %c0_40 = arith.constant 0 : index
      %49 = vector.load %arg12[%c0_39, %c0_40] : memref<1x32xf32, #tpu.memory_space<vmem>>, vector<1x32xf32>
      %50 = vector.broadcast %49 : vector<1x32xf32> to vector<8x32xf32>
      %51 = arith.addf %48, %50 : vector<8x32xf32>
      %c0_41 = arith.constant 0 : index
      %c0_42 = arith.constant 0 : index
      %c0_43 = arith.constant 0 : index
      %52 = vector.load %arg13[%c0_41, %c0_42, %c0_43] : memref<1x8x32xf32, #tpu.memory_space<vmem>>, vector<1x8x32xf32>
      %53 = vector.shape_cast %52 : vector<1x8x32xf32> to vector<8x32xf32>
      %54 = vector.shape_cast %51 : vector<8x32xf32> to vector<1x8x32xf32>
      tpu.vector_store %arg13[%c0_41, %c0_42, %c0_43], %54 {strides = array<i32>} : memref<1x8x32xf32, #tpu.memory_space<vmem>>, vector<1x8x32xf32>,
    } else {
    }
    return
  }
  func.func @transform_0(%arg0: i32, %arg1: i32, %arg2: i32) -> (i32, i32, i32) {
    %c0_i32 = arith.constant 0 : i32
    %c0_i32_0 = arith.constant 0 : i32
    return %arg0, %arg1, %c0_i32 : i32, i32, i32
  }
  func.func @transform_1(%arg0: i32, %arg1: i32, %arg2: i32) -> (i32, i32, i32) {
    %c0_i32 = arith.constant 0 : i32
    %c0_i32_0 = arith.constant 0 : i32
    return %arg0, %arg2, %c0_i32 : i32, i32, i32
  }
  func.func @transform_2(%arg0: i32, %arg1: i32, %arg2: i32) -> (i32, i32) {
    %c0_i32 = arith.constant 0 : i32
    %c0_i32_0 = arith.constant 0 : i32
    %c0_i32_1 = arith.constant 0 : i32
    return %c0_i32, %c0_i32_0 : i32, i32
  }
  func.func @transform_3(%arg0: i32, %arg1: i32, %arg2: i32) -> (i32, i32) {
    %c0_i32 = arith.constant 0 : i32
    %c0_i32_0 = arith.constant 0 : i32
    %c0_i32_1 = arith.constant 0 : i32
    return %c0_i32, %c0_i32_0 : i32, i32
  }
  func.func @transform_4(%arg0: i32, %arg1: i32, %arg2: i32) -> (i32, i32) {
    %c0_i32 = arith.constant 0 : i32
    %c0_i32_0 = arith.constant 0 : i32
    %c0_i32_1 = arith.constant 0 : i32
    return %c0_i32, %c0_i32_0 : i32, i32
  }
  func.func @transform_5(%arg0: i32, %arg1: i32, %arg2: i32) -> (i32, i32) {
    %c0_i32 = arith.constant 0 : i32
    %c0_i32_0 = arith.constant 0 : i32
    %c0_i32_1 = arith.constant 0 : i32
    return %c0_i32, %c0_i32_0 : i32, i32
  }
  func.func @transform_6(%arg0: i32, %arg1: i32, %arg2: i32) -> (i32, i32) {
    %c0_i32 = arith.constant 0 : i32
    %c0_i32_0 = arith.constant 0 : i32
    %c0_i32_1 = arith.constant 0 : i32
    return %c0_i32, %c0_i32_0 : i32, i32
  }
  func.func @transform_7(%arg0: i32, %arg1: i32, %arg2: i32) -> (i32, i32) {
    %c0_i32 = arith.constant 0 : i32
    %c0_i32_0 = arith.constant 0 : i32
    %c0_i32_1 = arith.constant 0 : i32
    return %c0_i32, %c0_i32_0 : i32, i32
  }
  func.func @transform_8(%arg0: i32, %arg1: i32, %arg2: i32) -> (i32, i32) {
    %c0_i32 = arith.constant 0 : i32
    %c0_i32_0 = arith.constant 0 : i32
    %c0_i32_1 = arith.constant 0 : i32
    return %c0_i32, %c0_i32_0 : i32, i32
  }
  func.func @transform_9(%arg0: i32, %arg1: i32, %arg2: i32) -> (i32, i32) {
    %c0_i32 = arith.constant 0 : i32
    %c0_i32_0 = arith.constant 0 : i32
    %c0_i32_1 = arith.constant 0 : i32
    return %c0_i32, %c0_i32_0 : i32, i32
  }
  func.func @transform_10(%arg0: i32, %arg1: i32, %arg2: i32) -> (i32, i32, i32) {
    %c0_i32 = arith.constant 0 : i32
    %c0_i32_0 = arith.constant 0 : i32
    return %arg0, %arg1, %c0_i32 : i32, i32, i32
  }
}

</mosaic_0001>

<llo_original>
// kernel: tpu_custom_call.1
$region0: #{tpu_custom_call.1}
  #allocation0 [shape = 'u32[]', space=smem, size = 0x4, offset = 0x4, fixed_abs, tag = 'smem constant byte address 0x4 - core index']
  #allocation1 [shape = 'u32[72,128]{1,0:T(1,128)}', space=vmem, size = 0x9000, scoped, tag = 'internal scratch']
  #allocation2 [shape = 'f32[8,32]{1,0:T(8,128)}', space=vmem, size = 0x1000, scoped, tag = 'scratch operand']
  #allocation3 [shape = 'f32[8,1]{1,0:T(8,128)}', space=vmem, size = 0x1000, scoped, tag = 'scratch operand']
  #allocation4 [shape = 'f32[8,1]{1,0:T(8,128)}', space=vmem, size = 0x1000, scoped, tag = 'scratch operand']
  #allocation5 [shape = 'f32[8,32]{1,0:T(8,128)}', space=vmem, size = 0x1000, scoped, tag = 'scratch operand']
  %s0 = inlined_call_operand.hbm [shape: f32[2,8,32], index: 0, kind: input, shape index: {}]
  %s1 = inlined_call_operand.hbm [shape: f32[2,8,32], index: 1, kind: input, shape index: {}]
  %s2 = inlined_call_operand.hbm [shape: f32[32,32], index: 2, kind: input, shape index: {}]
  %s3 = inlined_call_operand.hbm [shape: f32[32,32], index: 3, kind: input, shape index: {}]
  %s4 = inlined_call_operand.hbm [shape: f32[32,32], index: 4, kind: input, shape index: {}]
  %s5 = inlined_call_operand.vmem [shape: f32[1,32], index: 5, kind: input, shape index: {}]
  %s6 = inlined_call_operand.vmem [shape: f32[1,32], index: 6, kind: input, shape index: {}]
  %s7 = inlined_call_operand.vmem [shape: f32[1,32], index: 7, kind: input, shape index: {}]
  %s8 = inlined_call_operand.hbm [shape: f32[32,32], index: 8, kind: input, shape index: {}]
  %s9 = inlined_call_operand.vmem [shape: f32[1,32], index: 9, kind: input, shape index: {}]
  %s10 = inlined_call_operand.hbm [shape: f32[2,8,32], index: 10, kind: output, shape index: {}]
  %s11 = sld [smem:[#allocation0]]
  $region105: #{tpu_custom_call.1} parent=0
    _
  %s13 = ssub.s32 1, %s11
  %s14 = scalar_select 0, %s13, %s11
  $region1: #{tpu_custom_call.1} parent=0
    #allocation6 [shape = 'u8[8192]{0}', space=vmem, size = 0x2000, scoped, tag = 'input window, operand 0']
    #allocation7 [shape = 's32[2]{0}', space=sflag, size = 0x8, scoped, tag = 'scoped memory for tpu_custom_call.1']
    #allocation8 [shape = 's32[2]{0}', space=sflag, size = 0x8, scoped, tag = 'scoped memory for tpu_custom_call.1']
    #allocation9 [shape = 'u8[8192]{0}', space=vmem, size = 0x2000, scoped, tag = 'input window, operand 1']
    #allocation10 [shape = 's32[2]{0}', space=sflag, size = 0x8, scoped, tag = 'scoped memory for tpu_custom_call.1']
    #allocation11 [shape = 'u8[16384]{0}', space=vmem, size = 0x4000, scoped, tag = 'input window, operand 2, single buffered']
    #allocation12 [shape = 'u8[16384]{0}', space=vmem, size = 0x4000, scoped, tag = 'input window, operand 3, single buffered']
    #allocation13 [shape = 's32[1]{0}', space=sflag, size = 0x4, scoped, tag = 'scoped memory for tpu_custom_call.1']
    #allocation14 [shape = 'u8[16384]{0}', space=vmem, size = 0x4000, scoped, tag = 'input window, operand 4, single buffered']
    #allocation15 [shape = 'u8[16384]{0}', space=vmem, size = 0x4000, scoped, tag = 'input window, operand 8, single buffered']
    #allocation16 [shape = 's32[1]{0}', space=sflag, size = 0x4, scoped, tag = 'scoped memory for tpu_custom_call.1']
    #allocation17 [shape = 'u8[8192]{0}', space=vmem, size = 0x2000, scoped, tag = 'output window, operand 0']
    %15 = vsyncpa [#allocation7], 0
    %s16 = scalar_lea.sflag [#allocation7], 1
    %17 = vsyncpa %s16, 0
    %18 = vsyncpa [#allocation10], 0
    %s19 = scalar_lea.sflag [#allocation10], 1
    %20 = vsyncpa %s19, 0
    %21 = vsyncpa [#allocation13], 0
    %22 = vsyncpa [#allocation16], 0
    %23 = vsyncpa [#allocation8], 0
    %s24 = scalar_lea.sflag [#allocation8], 1
    %25 = vsyncpa %s24, 0
    loop: start=0, step=1, limit=4
    $region2: #{tpu_custom_call.1} parent=1 // loop_pre_header
      _
    $region3: #{tpu_custom_call.1} parent=1 // loop_header
      %s27 = sphi 0, %s31
      %p28 = scmp.ge.s32.totalorder %s27, 4
      %s34 = sphi 0, %s53
      %s35 = sphi 0, %s49
      %s36 = sphi 0, %s45
      %s37 = sphi 0, %s34
      %s38 = sphi 0, %s35
      %s39 = sphi 0, %s36
      %s40 = sphi 0, %s37
      %s41 = sphi 0, %s38
      %s42 = sphi 0, %s39
      %s58 = sphi 0, %s60
      %s61 = sphi 0, %s58
      %s62 = sphi 0, %s61
      %s78 = sphi 0, %s62
      %s86 = sphi 0, %s88
      %s89 = sphi 0, %s86
      %s90 = sphi 0, %s89
      %s106 = sphi 0, %s90
      %s110 = sphi 0, %s110
      %s112 = sphi 0, %s110
      %s113 = sphi 0, %s112
      %s127 = sphi 0, %s113
      %s131 = sphi 0, %s131
      %s133 = sphi 0, %s131
      %s134 = sphi 0, %s133
      %s148 = sphi 0, %s134
      %s152 = sphi 0, %s152
      %s154 = sphi 0, %s152
      %s155 = sphi 0, %s154
      %s169 = sphi 0, %s155
      %s173 = sphi 0, %s173
      %s175 = sphi 0, %s173
      %s176 = sphi 0, %s175
      %s190 = sphi 0, %s176
      %s194 = sphi 0, %s194
      %s196 = sphi 0, %s194
      %s197 = sphi 0, %s196
      %s211 = sphi 0, %s197
      %s215 = sphi 0, %s215
      %s217 = sphi 0, %s215
      %s218 = sphi 0, %s217
      %s232 = sphi 0, %s218
      %s236 = sphi 0, %s236
      %s238 = sphi 0, %s236
      %s239 = sphi 0, %s238
      %s253 = sphi 0, %s239
      %s257 = sphi 0, %s257
      %s259 = sphi 0, %s257
      %s260 = sphi 0, %s259
      %s274 = sphi 0, %s260
      %s282 = sphi 0, %s284
      %s285 = sphi 0, %s282
      %s286 = sphi 0, %s285
      %s302 = sphi 0, %s286
    $region4: #{tpu_custom_call.1} parent=1 // loop_header_branch
      %30 = sbr.rel (%p28) target = $region8
    $region5: #{tpu_custom_call.1} parent=1 // loop_body
      %s32 = ssub.s32 %s27, 1
      %s33 = ssub.s32 %s27, 2
      %s43 = sadd.s32 1, %s36
      %p44 = scmp.ge.s32.totalorder %s43, 1
      %s45 = scalar_select %p44, 0, %s43
      %s46 = sadd.s32 1, %s35
      %s47 = scalar_select %p44, %s46, %s35
      %p48 = scmp.ge.s32.totalorder %s47, 1
      %s49 = scalar_select %p48, 0, %s47
      %s50 = sadd.s32 1, %s34
      %s51 = scalar_select %p48, %s50, %s34
      %p52 = scmp.ge.s32.totalorder %s51, 2
      %s53 = scalar_select %p52, 0, %s51
      %s54 = ssub.s32 %s34, %s53
      %s55 = ssub.s32 %s35, %s49
      %s56 = sor.u32 %s54, %s55
      %p57 = scmp.eq.s32.totalorder %s56, 0
      %s59 = sadd.s32 %s58, 1
      %s60 = scalar_select %p57, %s58, %s59
      %p63 = pneg %p57
      %p64 = scmp.eq.s32.totalorder %s27, 1
      %p65 = por %p63, %p64
      %p66 = scmp.ne.s32.totalorder %s58, %s61
      %p67 = scmp.eq.s32.totalorder %s27, 0
      %p68 = por %p66, %p67
      %p69 = scmp.ne.s32.totalorder %s58, %s61
      %p70 = scmp.eq.s32.totalorder %s32, 1
      %p71 = por %p69, %p70
      %p72 = scmp.ne.s32.totalorder %s61, %s62
      %p73 = scmp.eq.s32.totalorder %s32, 0
      %p74 = por %p72, %p73
      %p75 = scmp.ne.s32.totalorder %s61, %s62
      %p76 = scmp.eq.s32.totalorder %s33, 1
      %p77 = por %p75, %p76
      %p79 = scmp.ne.s32.totalorder %s62, %s78
      %p80 = scmp.eq.s32.totalorder %s33, 0
      %p81 = por %p79, %p80
      %s82 = ssub.s32 %s34, %s53
      %s83 = ssub.s32 %s36, %s45
      %s84 = sor.u32 %s82, %s83
      %p85 = scmp.eq.s32.totalorder %s84, 0
      %s87 = sadd.s32 %s86, 1
      %s88 = scalar_select %p85, %s86, %s87
      %p91 = pneg %p85
      %p92 = scmp.eq.s32.totalorder %s27, 1
      %p93 = por %p91, %p92
      %p94 = scmp.ne.s32.totalorder %s86, %s89
      %p95 = scmp.eq.s32.totalorder %s27, 0
      %p96 = por %p94, %p95
      %p97 = scmp.ne.s32.totalorder %s86, %s89
      %p98 = scmp.eq.s32.totalorder %s32, 1
      %p99 = por %p97, %p98
      %p100 = scmp.ne.s32.totalorder %s89, %s90
      %p101 = scmp.eq.s32.totalorder %s32, 0
      %p102 = por %p100, %p101
      %p103 = scmp.ne.s32.totalorder %s89, %s90
      %p104 = scmp.eq.s32.totalorder %s33, 1
      %p105 = por %p103, %p104
      %p107 = scmp.ne.s32.totalorder %s90, %s106
      %p108 = scmp.eq.s32.totalorder %s33, 0
      %p109 = por %p107, %p108
      %s111 = sadd.s32 %s110, 1
      %p114 = scmp.eq.s32.totalorder %s27, 1
      %p115 = scmp.ne.s32.totalorder %s110, %s112
      %p116 = scmp.eq.s32.totalorder %s27, 0
      %p117 = por %p115, %p116
      %p118 = scmp.ne.s32.totalorder %s110, %s112
      %p119 = scmp.eq.s32.totalorder %s32, 1
      %p120 = por %p118, %p119
      %p121 = scmp.ne.s32.totalorder %s112, %s113
      %p122 = scmp.eq.s32.totalorder %s32, 0
      %p123 = por %p121, %p122
      %p124 = scmp.ne.s32.totalorder %s112, %s113
      %p125 = scmp.eq.s32.totalorder %s33, 1
      %p126 = por %p124, %p125
      %p128 = scmp.ne.s32.totalorder %s113, %s127
      %p129 = scmp.eq.s32.totalorder %s33, 0
      %p130 = por %p128, %p129
      %s132 = sadd.s32 %s131, 1
      %p135 = scmp.eq.s32.totalorder %s27, 1
      %p136 = scmp.ne.s32.totalorder %s131, %s133
      %p137 = scmp.eq.s32.totalorder %s27, 0
      %p138 = por %p136, %p137
      %p139 = scmp.ne.s32.totalorder %s131, %s133
      %p140 = scmp.eq.s32.totalorder %s32, 1
      %p141 = por %p139, %p140
      %p142 = scmp.ne.s32.totalorder %s133, %s134
      %p143 = scmp.eq.s32.totalorder %s32, 0
      %p144 = por %p142, %p143
      %p145 = scmp.ne.s32.totalorder %s133, %s134
      %p146 = scmp.eq.s32.totalorder %s33, 1
      %p147 = por %p145, %p146
      %p149 = scmp.ne.s32.totalorder %s134, %s148
      %p150 = scmp.eq.s32.totalorder %s33, 0
      %p151 = por %p149, %p150
      %s153 = sadd.s32 %s152, 1
      %p156 = scmp.eq.s32.totalorder %s27, 1
      %p157 = scmp.ne.s32.totalorder %s152, %s154
      %p158 = scmp.eq.s32.totalorder %s27, 0
      %p159 = por %p157, %p158
      %p160 = scmp.ne.s32.totalorder %s152, %s154
      %p161 = scmp.eq.s32.totalorder %s32, 1
      %p162 = por %p160, %p161
      %p163 = scmp.ne.s32.totalorder %s154, %s155
      %p164 = scmp.eq.s32.totalorder %s32, 0
      %p165 = por %p163, %p164
      %p166 = scmp.ne.s32.totalorder %s154, %s155
      %p167 = scmp.eq.s32.totalorder %s33, 1
      %p168 = por %p166, %p167
      %p170 = scmp.ne.s32.totalorder %s155, %s169
      %p171 = scmp.eq.s32.totalorder %s33, 0
      %p172 = por %p170, %p171
      %s174 = sadd.s32 %s173, 1
      %p177 = scmp.eq.s32.totalorder %s27, 1
      %p178 = scmp.ne.s32.totalorder %s173, %s175
      %p179 = scmp.eq.s32.totalorder %s27, 0
      %p180 = por %p178, %p179
      %p181 = scmp.ne.s32.totalorder %s173, %s175
      %p182 = scmp.eq.s32.totalorder %s32, 1
      %p183 = por %p181, %p182
      %p184 = scmp.ne.s32.totalorder %s175, %s176
      %p185 = scmp.eq.s32.totalorder %s32, 0
      %p186 = por %p184, %p185
      %p187 = scmp.ne.s32.totalorder %s175, %s176
      %p188 = scmp.eq.s32.totalorder %s33, 1
      %p189 = por %p187, %p188
      %p191 = scmp.ne.s32.totalorder %s176, %s190
      %p192 = scmp.eq.s32.totalorder %s33, 0
      %p193 = por %p191, %p192
      %s195 = sadd.s32 %s194, 1
      %p198 = scmp.eq.s32.totalorder %s27, 1
      %p199 = scmp.ne.s32.totalorder %s194, %s196
      %p200 = scmp.eq.s32.totalorder %s27, 0
      %p201 = por %p199, %p200
      %p202 = scmp.ne.s32.totalorder %s194, %s196
      %p203 = scmp.eq.s32.totalorder %s32, 1
      %p204 = por %p202, %p203
      %p205 = scmp.ne.s32.totalorder %s196, %s197
      %p206 = scmp.eq.s32.totalorder %s32, 0
      %p207 = por %p205, %p206
      %p208 = scmp.ne.s32.totalorder %s196, %s197
      %p209 = scmp.eq.s32.totalorder %s33, 1
      %p210 = por %p208, %p209
      %p212 = scmp.ne.s32.totalorder %s197, %s211
      %p213 = scmp.eq.s32.totalorder %s33, 0
      %p214 = por %p212, %p213
      %s216 = sadd.s32 %s215, 1
      %p219 = scmp.eq.s32.totalorder %s27, 1
      %p220 = scmp.ne.s32.totalorder %s215, %s217
      %p221 = scmp.eq.s32.totalorder %s27, 0
      %p222 = por %p220, %p221
      %p223 = scmp.ne.s32.totalorder %s215, %s217
      %p224 = scmp.eq.s32.totalorder %s32, 1
      %p225 = por %p223, %p224
      %p226 = scmp.ne.s32.totalorder %s217, %s218
      %p227 = scmp.eq.s32.totalorder %s32, 0
      %p228 = por %p226, %p227
      %p229 = scmp.ne.s32.totalorder %s217, %s218
      %p230 = scmp.eq.s32.totalorder %s33, 1
      %p231 = por %p229, %p230
      %p233 = scmp.ne.s32.totalorder %s218, %s232
      %p234 = scmp.eq.s32.totalorder %s33, 0
      %p235 = por %p233, %p234
      %s237 = sadd.s32 %s236, 1
      %p240 = scmp.eq.s32.totalorder %s27, 1
      %p241 = scmp.ne.s32.totalorder %s236, %s238
      %p242 = scmp.eq.s32.totalorder %s27, 0
      %p243 = por %p241, %p242
      %p244 = scmp.ne.s32.totalorder %s236, %s238
      %p245 = scmp.eq.s32.totalorder %s32, 1
      %p246 = por %p244, %p245
      %p247 = scmp.ne.s32.totalorder %s238, %s239
      %p248 = scmp.eq.s32.totalorder %s32, 0
      %p249 = por %p247, %p248
      %p250 = scmp.ne.s32.totalorder %s238, %s239
      %p251 = scmp.eq.s32.totalorder %s33, 1
      %p252 = por %p250, %p251
      %p254 = scmp.ne.s32.totalorder %s239, %s253
      %p255 = scmp.eq.s32.totalorder %s33, 0
      %p256 = por %p254, %p255
      %s258 = sadd.s32 %s257, 1
      %p261 = scmp.eq.s32.totalorder %s27, 1
      %p262 = scmp.ne.s32.totalorder %s257, %s259
      %p263 = scmp.eq.s32.totalorder %s27, 0
      %p264 = por %p262, %p263
      %p265 = scmp.ne.s32.totalorder %s257, %s259
      %p266 = scmp.eq.s32.totalorder %s32, 1
      %p267 = por %p265, %p266
      %p268 = scmp.ne.s32.totalorder %s259, %s260
      %p269 = scmp.eq.s32.totalorder %s32, 0
      %p270 = por %p268, %p269
      %p271 = scmp.ne.s32.totalorder %s259, %s260
      %p272 = scmp.eq.s32.totalorder %s33, 1
      %p273 = por %p271, %p272
      %p275 = scmp.ne.s32.totalorder %s260, %s274
      %p276 = scmp.eq.s32.totalorder %s33, 0
      %p277 = por %p275, %p276
      %s278 = ssub.s32 %s34, %s53
      %s279 = ssub.s32 %s35, %s49
      %s280 = sor.u32 %s278, %s279
      %p281 = scmp.eq.s32.totalorder %s280, 0
      %s283 = sadd.s32 %s282, 1
      %s284 = scalar_select %p281, %s282, %s283
      %p287 = pneg %p281
      %p288 = scmp.eq.s32.totalorder %s27, 1
      %p289 = por %p287, %p288
      %p290 = scmp.ne.s32.totalorder %s282, %s285
      %p291 = scmp.eq.s32.totalorder %s27, 0
      %p292 = por %p290, %p291
      %p293 = scmp.ne.s32.totalorder %s282, %s285
      %p294 = scmp.eq.s32.totalorder %s32, 1
      %p295 = por %p293, %p294
      %p296 = scmp.ne.s32.totalorder %s285, %s286
      %p297 = scmp.eq.s32.totalorder %s32, 0
      %p298 = por %p296, %p297
      %p299 = scmp.ne.s32.totalorder %s285, %s286
      %p300 = scmp.eq.s32.totalorder %s33, 1
      %p301 = por %p299, %p300
      %p303 = scmp.ne.s32.totalorder %s286, %s302
      %p304 = scmp.eq.s32.totalorder %s33, 0
      %p305 = por %p303, %p304
      %p306 = scmp.le.s32.totalorder 1, %s27
      %p307 = scmp.lt.s32.totalorder %s27, 3
      %p308 = pnand %p306, %p307
      %p309 = pneg %p308
      // Predicated region
      $region9: #{tpu_custom_call.1} parent=5 // pred_check
        _
      $region10: #{tpu_custom_call.1} parent=5 // pred_check_branch
        %311 = sbr.rel (%p308) target = $region12
      $region11: #{tpu_custom_call.1} parent=5 // pred_region
        %s312 = ssub.s32 %s27, 1
        // Predicated region
        $region13: #{tpu_custom_call.1} parent=11 // pred_check
          %p313 = pneg %p123
        $region14: #{tpu_custom_call.1} parent=11 // pred_check_branch
          %315 = sbr.rel (%p313) target = $region16
        $region15: #{tpu_custom_call.1} parent=11 // pred_region
          %317 = vsyncadd [#allocation10], 0
          %s318 = sshll.u32 %s2, 4
          %s319 = int_to_ptr.hbm [resolvable:$true] %s318
          %s320 = sshll.u32 [#allocation11], 4
          %s321 = int_to_ptr.vmem [resolvable:$true] %s320
          %326 = dma.hbm_to_vmem [thread:$0]  %s319, 512, %s321, [#allocation10], 128, 128, 8
        $region16: #{tpu_custom_call.1} parent=11 // pred_fallthru
          _
        // Predicated region
        $region17: #{tpu_custom_call.1} parent=11 // pred_check
          %p327 = pneg %p144
        $region18: #{tpu_custom_call.1} parent=11 // pred_check_branch
          %329 = sbr.rel (%p327) target = $region20
        $region19: #{tpu_custom_call.1} parent=11 // pred_region
          %331 = vsyncadd [#allocation13], 0
          %s332 = sshll.u32 %s3, 4
          %s333 = int_to_ptr.hbm [resolvable:$true] %s332
          %s334 = sshll.u32 [#allocation12], 4
          %s335 = int_to_ptr.vmem [resolvable:$true] %s334
          %340 = dma.hbm_to_vmem [thread:$0]  %s333, 512, %s335, [#allocation13], 128, 128, 8
        $region20: #{tpu_custom_call.1} parent=11 // pred_fallthru
          _
        // Predicated region
        $region21: #{tpu_custom_call.1} parent=11 // pred_check
          %p341 = pneg %p165
        $region22: #{tpu_custom_call.1} parent=11 // pred_check_branch
          %343 = sbr.rel (%p341) target = $region24
        $region23: #{tpu_custom_call.1} parent=11 // pred_region
          %345 = vsyncadd [#allocation13], 0
          %s346 = sshll.u32 %s4, 4
          %s347 = int_to_ptr.hbm [resolvable:$true] %s346
          %s348 = sshll.u32 [#allocation14], 4
          %s349 = int_to_ptr.vmem [resolvable:$true] %s348
          %354 = dma.hbm_to_vmem [thread:$0]  %s347, 512, %s349, [#allocation13], 128, 128, 8
        $region24: #{tpu_custom_call.1} parent=11 // pred_fallthru
          _
        // Predicated region
        $region25: #{tpu_custom_call.1} parent=11 // pred_check
          %p355 = pneg %p186
        $region26: #{tpu_custom_call.1} parent=11 // pred_check_branch
          %357 = sbr.rel (%p355) target = $region28
        $region27: #{tpu_custom_call.1} parent=11 // pred_region
          _
        $region28: #{tpu_custom_call.1} parent=11 // pred_fallthru
          _
        // Predicated region
        $region29: #{tpu_custom_call.1} parent=11 // pred_check
          %p358 = pneg %p207
        $region30: #{tpu_custom_call.1} parent=11 // pred_check_branch
          %360 = sbr.rel (%p358) target = $region32
        $region31: #{tpu_custom_call.1} parent=11 // pred_region
          _
        $region32: #{tpu_custom_call.1} parent=11 // pred_fallthru
          _
        // Predicated region
        $region33: #{tpu_custom_call.1} parent=11 // pred_check
          %p361 = pneg %p228
        $region34: #{tpu_custom_call.1} parent=11 // pred_check_branch
          %363 = sbr.rel (%p361) target = $region36
        $region35: #{tpu_custom_call.1} parent=11 // pred_region
          _
        $region36: #{tpu_custom_call.1} parent=11 // pred_fallthru
          _
        // Predicated region
        $region37: #{tpu_custom_call.1} parent=11 // pred_check
          %p364 = pneg %p249
        $region38: #{tpu_custom_call.1} parent=11 // pred_check_branch
          %366 = sbr.rel (%p364) target = $region40
        $region39: #{tpu_custom_call.1} parent=11 // pred_region
          %368 = vsyncadd [#allocation16], 0
          %s369 = sshll.u32 %s8, 4
          %s370 = int_to_ptr.hbm [resolvable:$true] %s369
          %s371 = sshll.u32 [#allocation15], 4
          %s372 = int_to_ptr.vmem [resolvable:$true] %s371
          %377 = dma.hbm_to_vmem [thread:$0]  %s370, 512, %s372, [#allocation16], 128, 128, 8
        $region40: #{tpu_custom_call.1} parent=11 // pred_fallthru
          _
        // Predicated region
        $region41: #{tpu_custom_call.1} parent=11 // pred_check
          %p378 = pneg %p270
        $region42: #{tpu_custom_call.1} parent=11 // pred_check_branch
          %380 = sbr.rel (%p378) target = $region44
        $region43: #{tpu_custom_call.1} parent=11 // pred_region
          _
        $region44: #{tpu_custom_call.1} parent=11 // pred_fallthru
          _
      $region12: #{tpu_custom_call.1} parent=5 // pred_fallthru
        _
      %p381 = scmp.lt.s32.totalorder %s27, 2
      // Predicated region
      $region45: #{tpu_custom_call.1} parent=5 // pred_check
        %p382 = pneg %p381
      $region46: #{tpu_custom_call.1} parent=5 // pred_check_branch
        %384 = sbr.rel (%p382) target = $region48
      $region47: #{tpu_custom_call.1} parent=5 // pred_region
        // Predicated region
        $region49: #{tpu_custom_call.1} parent=47 // pred_check
          %p385 = pneg %p68
        $region50: #{tpu_custom_call.1} parent=47 // pred_check_branch
          %387 = sbr.rel (%p385) target = $region52
        $region51: #{tpu_custom_call.1} parent=47 // pred_region
          %s388 = sand.u32 %s58, 1
          %s389 = scalar_lea.sflag [#allocation7], %s388
          %s390 = sand.u32 %s58, 1
          %s391 = smul.addr %s390, 8
          %s392 = scalar_lea.vmem [#allocation6], %s391
          %394 = vsyncadd %s389, 0
          %s395 = sadd.s32 %s35, %s34
          %s396 = smul.addr %s395, 8
          %s397 = scalar_lea.hbm %s0, %s396
          %s399 = sshll.u32 %s397, 4
          %s400 = int_to_ptr.hbm [resolvable:$true] %s399
          %s401 = sshll.u32 %s392, 4
          %s402 = int_to_ptr.vmem [resolvable:$true] %s401
          %404 = dma.hbm_to_vmem [thread:$0]  %s400, 128, %s402, %s389
        $region52: #{tpu_custom_call.1} parent=47 // pred_fallthru
          _
        // Predicated region
        $region53: #{tpu_custom_call.1} parent=47 // pred_check
          %p405 = pneg %p96
        $region54: #{tpu_custom_call.1} parent=47 // pred_check_branch
          %407 = sbr.rel (%p405) target = $region56
        $region55: #{tpu_custom_call.1} parent=47 // pred_region
          %s408 = sand.u32 %s27, 1
          %s409 = scalar_lea.sflag [#allocation10], %s408
          %s410 = sand.u32 %s86, 1
          %s411 = smul.addr %s410, 8
          %s412 = scalar_lea.vmem [#allocation9], %s411
          %414 = vsyncadd %s409, 0
          %s415 = sadd.s32 %s36, %s34
          %s416 = smul.addr %s415, 8
          %s417 = scalar_lea.hbm %s1, %s416
          %s419 = sshll.u32 %s417, 4
          %s420 = int_to_ptr.hbm [resolvable:$true] %s419
          %s421 = sshll.u32 %s412, 4
          %s422 = int_to_ptr.vmem [resolvable:$true] %s421
          %424 = dma.hbm_to_vmem [thread:$0]  %s420, 128, %s422, %s409
        $region56: #{tpu_custom_call.1} parent=47 // pred_fallthru
          _
      $region48: #{tpu_custom_call.1} parent=5 // pred_fallthru
        _
      %p425 = scmp.le.s32.totalorder 1, %s27
      %p426 = scmp.lt.s32.totalorder %s27, 3
      %p427 = pnand %p425, %p426
      %p428 = pneg %p427
      // Predicated region
      $region57: #{tpu_custom_call.1} parent=5 // pred_check
        _
      $region58: #{tpu_custom_call.1} parent=5 // pred_check_branch
        %430 = sbr.rel (%p427) target = $region60
      $region59: #{tpu_custom_call.1} parent=5 // pred_region
        %s431 = ssub.s32 %s27, 1
        %s432 = sand.u32 %s61, 1
        %s433 = scalar_lea.sflag [#allocation7], %s432
        %s434 = sand.u32 %s61, 1
        %s435 = smul.addr %s434, 8
        %s436 = scalar_lea.vmem [#allocation6], %s435
        // Predicated region
        $region61: #{tpu_custom_call.1} parent=59 // pred_check
          %p437 = pneg %p74
        $region62: #{tpu_custom_call.1} parent=59 // pred_check_branch
          %439 = sbr.rel (%p437) target = $region64
        $region63: #{tpu_custom_call.1} parent=59 // pred_region
          %441 = dma.done %s433, 128
        $region64: #{tpu_custom_call.1} parent=59 // pred_fallthru
          _
        %s442 = sand.u32 %s32, 1
        %s443 = scalar_lea.sflag [#allocation10], %s442
        %s444 = sand.u32 %s89, 1
        %s445 = smul.addr %s444, 8
        %s446 = scalar_lea.vmem [#allocation9], %s445
        // Predicated region
        $region65: #{tpu_custom_call.1} parent=59 // pred_check
          %p447 = pneg %p102
        $region66: #{tpu_custom_call.1} parent=59 // pred_check_branch
          %449 = sbr.rel (%p447) target = $region68
        $region67: #{tpu_custom_call.1} parent=59 // pred_region
          %451 = dma.done %s443, 128
        $region68: #{tpu_custom_call.1} parent=59 // pred_fallthru
          _
        // Predicated region
        $region69: #{tpu_custom_call.1} parent=59 // pred_check
          %p452 = pneg %p123
        $region70: #{tpu_custom_call.1} parent=59 // pred_check_branch
          %454 = sbr.rel (%p452) target = $region72
        $region71: #{tpu_custom_call.1} parent=59 // pred_region
          %456 = dma.done [#allocation10], 512
        $region72: #{tpu_custom_call.1} parent=59 // pred_fallthru
          _
        // Predicated region
        $region73: #{tpu_custom_call.1} parent=59 // pred_check
          %p457 = pneg %p144
        $region74: #{tpu_custom_call.1} parent=59 // pred_check_branch
          %459 = sbr.rel (%p457) target = $region76
        $region75: #{tpu_custom_call.1} parent=59 // pred_region
          %461 = dma.done [#allocation13], 512
        $region76: #{tpu_custom_call.1} parent=59 // pred_fallthru
          _
        // Predicated region
        $region77: #{tpu_custom_call.1} parent=59 // pred_check
          %p462 = pneg %p165
        $region78: #{tpu_custom_call.1} parent=59 // pred_check_branch
          %464 = sbr.rel (%p462) target = $region80
        $region79: #{tpu_custom_call.1} parent=59 // pred_region
          %466 = dma.done [#allocation13], 512
        $region80: #{tpu_custom_call.1} parent=59 // pred_fallthru
          _
        // Predicated region
        $region81: #{tpu_custom_call.1} parent=59 // pred_check
          %p467 = pneg %p249
        $region82: #{tpu_custom_call.1} parent=59 // pred_check_branch
          %469 = sbr.rel (%p467) target = $region84
        $region83: #{tpu_custom_call.1} parent=59 // pred_region
          %471 = dma.done [#allocation16], 512
        $region84: #{tpu_custom_call.1} parent=59 // pred_fallthru
          _
        %s472 = sand.u32 %s61, 1
        %s473 = scalar_lea.sflag [#allocation7], %s472
        %s474 = sand.u32 %s61, 1
        %s475 = smul.addr %s474, 8
        %s476 = scalar_lea.vmem [#allocation6], %s475
        %p477 = pneg %p74
        %p478 = pneg %p71
        %s479 = sand.u32 %s32, 1
        %s480 = scalar_lea.sflag [#allocation10], %s479
        %s481 = sand.u32 %s89, 1
        %s482 = smul.addr %s481, 8
        %s483 = scalar_lea.vmem [#allocation9], %s482
        %p484 = pneg %p102
        %p485 = pneg %p99
        %p486 = pneg %p123
        %p487 = pneg %p120
        %p488 = pneg %p144
        %p489 = pneg %p141
        %p490 = pneg %p165
        %p491 = pneg %p162
        %p492 = pneg %p186
        %p493 = pneg %p183
        %p494 = pneg %p207
        %p495 = pneg %p204
        %p496 = pneg %p228
        %p497 = pneg %p225
        %p498 = pneg %p249
        %p499 = pneg %p246
        %p500 = pneg %p270
        %p501 = pneg %p267
        %p502 = pneg %p298
        %p503 = pneg %p295
        %s504 = sand.u32 %s285, 1
        %s505 = scalar_lea.sflag [#allocation8], %s504
        %s506 = sand.u32 %s285, 1
        %s507 = smul.addr %s506, 8
        %s508 = scalar_lea.vmem [#allocation17], %s507
        %p509 = scmp.eq.s32.totalorder %s39, 0
        // Predicated region
        $region85: #{tpu_custom_call.1} parent=59 // pred_check
          %p510 = pneg %p509
        $region86: #{tpu_custom_call.1} parent=59 // pred_check_branch
          %512 = sbr.rel (%p510) target = $region88
        $region87: #{tpu_custom_call.1} parent=59 // pred_region
          %v513 = vld [vmem:[%s436] sm:$0xff]
          %v514 = vld [vmem:[#allocation11] sm:$0xff]
          %v515 = vld [vmem:[#allocation11 + $0x8] sm:$0xff]
          %v516 = vld [vmem:[#allocation11 + $0x10] sm:$0xff]
          %v517 = vld [vmem:[#allocation11 + $0x18] sm:$0xff]
          %v518 = vld [vmem:[%s5] sm:$0x1]
          %v520 = vperm.slane %v518, 0
          %vm522 = vcmask 261120
          %v524 = vsel %vm522, %v513, 0
          %526 = vmatpush.msra.mxu0 0.0
          %527 = vmatpush.msra.mxu0 0.0
          %528 = vmatpush.msra.mxu0 0.0
          %529 = vmatpush.msra.mxu0 0.0
          %530 = vmatpush.msra.mxu0 0.0
          %531 = vmatpush.msra.mxu0 0.0
          %532 = vmatpush.msra.mxu0 0.0
          %533 = vmatpush.msra.mxu0 0.0
          %534 = vmatpush.msra.mxu0 0.0
          %535 = vmatpush.msra.mxu0 0.0
          %536 = vmatpush.msra.mxu0 0.0
          %537 = vmatpush.msra.mxu0 0.0
          %538 = vmatpush.msra.mxu0 %v517
          %539 = vmatpush.msra.mxu0 %v516
          %540 = vmatpush.msra.mxu0 %v515
          %541 = vmatpush.msra.mxu0 %v514
          %542 = vmatmul.f32.gmra.mxu0 %v524
          %v543 = vpop.f32.mrf.mxu0
          %v544 = vadd.f32 %v520, %v543
          %545 = vdwg.mxu0
          %v546 = vmul.f32 %v544, 0.17677669
          %547 = vst.msk [vmem:[#allocation2] sm:$0xff] %vm522, %v546
          %vm548 = vcmask 7168
          %549 = vst.msk [vmem:[#allocation3] sm:$0xff] %vm548, -inf
          %550 = vst.msk [vmem:[#allocation4] sm:$0xff] %vm548, 0.0
          %551 = vst.msk [vmem:[#allocation5] sm:$0xff] %vm522, 0.0
        $region88: #{tpu_custom_call.1} parent=59 // pred_fallthru
          _
        %v552 = vld [vmem:[%s446] sm:$0xff]
        %v553 = vld [vmem:[#allocation12] sm:$0xff]
        %v554 = vld [vmem:[#allocation12 + $0x8] sm:$0xff]
        %v555 = vld [vmem:[#allocation12 + $0x10] sm:$0xff]
        %v556 = vld [vmem:[#allocation12 + $0x18] sm:$0xff]
        %v557 = vld [vmem:[%s6] sm:$0x1]
        %v559 = vperm.slane %v557, 0
        %vm561 = vcmask 261120
        %v563 = vsel %vm561, %v552, 0
        %565 = vmatpush.msra.mxu0 0.0
        %566 = vmatpush.msra.mxu0 0.0
        %567 = vmatpush.msra.mxu0 0.0
        %568 = vmatpush.msra.mxu0 0.0
        %569 = vmatpush.msra.mxu0 0.0
        %570 = vmatpush.msra.mxu0 0.0
        %571 = vmatpush.msra.mxu0 0.0
        %572 = vmatpush.msra.mxu0 0.0
        %573 = vmatpush.msra.mxu0 0.0
        %574 = vmatpush.msra.mxu0 0.0
        %575 = vmatpush.msra.mxu0 0.0
        %576 = vmatpush.msra.mxu0 0.0
        %577 = vmatpush.msra.mxu0 %v556
        %578 = vmatpush.msra.mxu0 %v555
        %579 = vmatpush.msra.mxu0 %v554
        %580 = vmatpush.msra.mxu0 %v553
        %581 = vmatmul.f32.gmra.mxu0 %v563
        %v582 = vpop.f32.mrf.mxu0
        %v583 = vadd.f32 %v559, %v582
        %584 = vdwg.mxu0
        %v585 = vld [vmem:[#allocation14] sm:$0xff]
        %v586 = vld [vmem:[#allocation14 + $0x8] sm:$0xff]
        %v587 = vld [vmem:[#allocation14 + $0x10] sm:$0xff]
        %v588 = vld [vmem:[#allocation14 + $0x18] sm:$0xff]
        %v589 = vld [vmem:[%s7] sm:$0x1]
        %v591 = vperm.slane %v589, 0
        %593 = vmatpush.msra.mxu0 0.0
        %594 = vmatpush.msra.mxu0 0.0
        %595 = vmatpush.msra.mxu0 0.0
        %596 = vmatpush.msra.mxu0 0.0
        %597 = vmatpush.msra.mxu0 0.0
        %598 = vmatpush.msra.mxu0 0.0
        %599 = vmatpush.msra.mxu0 0.0
        %600 = vmatpush.msra.mxu0 0.0
        %601 = vmatpush.msra.mxu0 0.0
        %602 = vmatpush.msra.mxu0 0.0
        %603 = vmatpush.msra.mxu0 0.0
        %604 = vmatpush.msra.mxu0 0.0
        %605 = vmatpush.msra.mxu0 %v588
        %606 = vmatpush.msra.mxu0 %v587
        %607 = vmatpush.msra.mxu0 %v586
        %608 = vmatpush.msra.mxu0 %v585
        %609 = vmatmul.f32.gmra.mxu0 %v563
        %v610 = vpop.f32.mrf.mxu0
        %v611 = vadd.f32 %v591, %v610
        %612 = vdwg.mxu0
        %v613 = vld [vmem:[#allocation2] sm:$0xff]
        %v615 = vsel %vm561, %v613, 0
        %v618 = vsel %vm561, %v583, 0
        %620 = vmatpush.xpose.msra.mxu0 0.0
        %621 = vmatpush.xpose.msra.mxu0 0.0
        %622 = vmatpush.xpose.msra.mxu0 0.0
        %623 = vmatpush.xpose.msra.mxu0 0.0
        %624 = vmatpush.xpose.msra.mxu0 0.0
        %625 = vmatpush.xpose.msra.mxu0 0.0
        %626 = vmatpush.xpose.msra.mxu0 0.0
        %627 = vmatpush.xpose.msra.mxu0 0.0
        %628 = vmatpush.xpose.msra.mxu0 0.0
        %629 = vmatpush.xpose.msra.mxu0 0.0
        %630 = vmatpush.xpose.msra.mxu0 0.0
        %631 = vmatpush.xpose.msra.mxu0 0.0
        %632 = vmatpush.xpose.msra.mxu0 0.0
        %633 = vmatpush.xpose.msra.mxu0 0.0
        %634 = vmatpush.xpose.msra.mxu0 0.0
        %635 = vmatpush.xpose.msra.mxu0 %v618
        %636 = vmatmul.f32.gmra.mxu0 %v615
        %v637 = vpop.f32.mrf.mxu0
        %v638 = vadd.f32 0.0, %v637
        %639 = vdwg.mxu0
        %v640 = vld [vmem:[#allocation3] sm:$0xff]
        %vm641 = vcmask 64512
        %v642 = vsel %vm641, %v638, -inf
        %643 = vmax.xlane.f32.xlu0 %v642
        %v644 = vpop.xlane.xlu0 %643
        %v645 = vmax.f32 %v640, %v644
        %v646 = vsub.f32 %v640, %v645
        %v647 = vmul.f32 %v646, 1.442695
        %v648 = vpow.pop %v647
        %650 = vset.pattern.permute.xlu0 0
        %651 = vperm.xlu0 %650, %v645
        %v652 = vpop.permute.xlu0 %651
        %v654 = vsub.f32 %v638, %v652
        %v655 = vmul.f32 %v654, 1.442695
        %v656 = vpow.pop %v655
        %v657 = vld [vmem:[#allocation4] sm:$0xff]
        %v658 = vmul.f32 %v648, %v657
        %v659 = vsel %vm641, %v656, 0.0
        %660 = vadd.xlane.f32.xlu0 %v659
        %v661 = vpop.xlane.xlu0 %660
        %v662 = vadd.f32 %v658, %v661
        %vm663 = vcmask 7168
        %664 = vst.msk [vmem:[#allocation4] sm:$0xff] %vm663, %v662
        %v665 = vld [vmem:[#allocation5] sm:$0xff]
        %667 = vset.pattern.permute.xlu0 0
        %668 = vperm.xlu0 %667, %v648
        %v669 = vpop.permute.xlu0 %668
        %v671 = vmul.f32 %v669, %v665
        %v673 = vsel %vm641, %v656, 0
        %675 = vmatpush.msra.mxu0 0.0
        %676 = vmatpush.msra.mxu0 0.0
        %677 = vmatpush.msra.mxu0 0.0
        %678 = vmatpush.msra.mxu0 0.0
        %679 = vmatpush.msra.mxu0 0.0
        %680 = vmatpush.msra.mxu0 0.0
        %681 = vmatpush.msra.mxu0 0.0
        %682 = vmatpush.msra.mxu0 0.0
        %683 = vmatpush.msra.mxu0 0.0
        %684 = vmatpush.msra.mxu0 0.0
        %685 = vmatpush.msra.mxu0 0.0
        %686 = vmatpush.msra.mxu0 0.0
        %687 = vmatpush.msra.mxu0 0.0
        %688 = vmatpush.msra.mxu0 0.0
        %689 = vmatpush.msra.mxu0 0.0
        %690 = vmatpush.msra.mxu0 %v611
        %691 = vmatmul.f32.gmra.mxu0 %v673
        %v692 = vpop.f32.mrf.mxu0
        %v693 = vadd.f32 0.0, %v692
        %694 = vdwg.mxu0
        %v695 = vadd.f32 %v671, %v693
        %696 = vst.msk [vmem:[#allocation5] sm:$0xff] %vm561, %v695
        %697 = vst.msk [vmem:[#allocation3] sm:$0xff] %vm663, %v645
        // Predicated region
        $region89: #{tpu_custom_call.1} parent=59 // pred_check
          %p698 = pneg %p509
        $region90: #{tpu_custom_call.1} parent=59 // pred_check_branch
          %700 = sbr.rel (%p698) target = $region92
        $region91: #{tpu_custom_call.1} parent=59 // pred_region
          %v701 = vld [vmem:[#allocation4] sm:$0xff]
          %v702 = vrcp.pop %v701
          %v703 = vld [vmem:[#allocation5] sm:$0xff]
          %705 = vset.pattern.permute.xlu0 0
          %706 = vperm.xlu0 %705, %v702
          %v707 = vpop.permute.xlu0 %706
          %v709 = vmul.f32 %v703, %v707
          %v710 = vld [vmem:[#allocation15] sm:$0xff]
          %v711 = vld [vmem:[#allocation15 + $0x8] sm:$0xff]
          %v712 = vld [vmem:[#allocation15 + $0x10] sm:$0xff]
          %v713 = vld [vmem:[#allocation15 + $0x18] sm:$0xff]
          %v714 = vld [vmem:[%s9] sm:$0x1]
          %v716 = vperm.slane %v714, 0
          %v719 = vsel %vm561, %v709, 0
          %721 = vmatpush.msra.mxu0 0.0
          %722 = vmatpush.msra.mxu0 0.0
          %723 = vmatpush.msra.mxu0 0.0
          %724 = vmatpush.msra.mxu0 0.0
          %725 = vmatpush.msra.mxu0 0.0
          %726 = vmatpush.msra.mxu0 0.0
          %727 = vmatpush.msra.mxu0 0.0
          %728 = vmatpush.msra.mxu0 0.0
          %729 = vmatpush.msra.mxu0 0.0
          %730 = vmatpush.msra.mxu0 0.0
          %731 = vmatpush.msra.mxu0 0.0
          %732 = vmatpush.msra.mxu0 0.0
          %733 = vmatpush.msra.mxu0 %v713
          %734 = vmatpush.msra.mxu0 %v712
          %735 = vmatpush.msra.mxu0 %v711
          %736 = vmatpush.msra.mxu0 %v710
          %737 = vmatmul.f32.gmra.mxu0 %v719
          %v738 = vpop.f32.mrf.mxu0
          %v739 = vadd.f32 %v716, %v738
          %740 = vdwg.mxu0
          %741 = vst.msk [vmem:[%s508] sm:$0xff] %vm561, %v739
        $region92: #{tpu_custom_call.1} parent=59 // pred_fallthru
          _
        %s742 = sand.u32 %s285, 1
        %s743 = scalar_lea.sflag [#allocation8], %s742
        %s744 = sand.u32 %s285, 1
        %s745 = smul.addr %s744, 8
        %s746 = scalar_lea.vmem [#allocation17], %s745
        // Predicated region
        $region93: #{tpu_custom_call.1} parent=59 // pred_check
          %p747 = pneg %p295
        $region94: #{tpu_custom_call.1} parent=59 // pred_check_branch
          %749 = sbr.rel (%p747) target = $region96
        $region95: #{tpu_custom_call.1} parent=59 // pred_region
          %751 = vsyncadd %s743, 0
          %s752 = sadd.s32 %s38, %s37
          %s753 = smul.addr %s752, 8
          %s754 = scalar_lea.hbm %s10, %s753
          %s756 = sshll.u32 %s746, 4
          %s757 = int_to_ptr.vmem [resolvable:$true] %s756
          %s758 = sshll.u32 %s754, 4
          %s759 = int_to_ptr.hbm [resolvable:$true] %s758
          %761 = dma.vmem_to_hbm [thread:$0]  %s757, 128, %s759, %s743
        $region96: #{tpu_custom_call.1} parent=59 // pred_fallthru
          _
      $region60: #{tpu_custom_call.1} parent=5 // pred_fallthru
        _
      %p762 = scmp.le.s32.totalorder 2, %s27
      // Predicated region
      $region97: #{tpu_custom_call.1} parent=5 // pred_check
        %p763 = pneg %p762
      $region98: #{tpu_custom_call.1} parent=5 // pred_check_branch
        %765 = sbr.rel (%p763) target = $region100
      $region99: #{tpu_custom_call.1} parent=5 // pred_region
        %s766 = ssub.s32 %s27, 2
        // Predicated region
        $region101: #{tpu_custom_call.1} parent=99 // pred_check
          %p767 = pneg %p301
        $region102: #{tpu_custom_call.1} parent=99 // pred_check_branch
          %769 = sbr.rel (%p767) target = $region104
        $region103: #{tpu_custom_call.1} parent=99 // pred_region
          %s770 = sand.u32 %s286, 1
          %s771 = scalar_lea.sflag [#allocation8], %s770
          %s772 = sand.u32 %s286, 1
          %s773 = smul.addr %s772, 8
          %s774 = scalar_lea.vmem [#allocation17], %s773
          %776 = dma.done %s771, 128
        $region104: #{tpu_custom_call.1} parent=99 // pred_fallthru
          _
      $region100: #{tpu_custom_call.1} parent=5 // pred_fallthru
        _
    $region6: #{tpu_custom_call.1} parent=1 // loop_footer
      %s31 = sadd.s32 1, %s27
    $region7: #{tpu_custom_call.1} parent=1 // loop_footer_branch
      %26 = sbr.rel target = $region3
    $region8: #{tpu_custom_call.1} parent=1 // loop_exit
      _
    %777 = vsyncpa [#allocation7], 1
    %s778 = scalar_lea.sflag [#allocation7], 1
    %779 = vsyncpa %s778, 1
    %780 = vsyncpa [#allocation10], 1
    %s781 = scalar_lea.sflag [#allocation10], 1
    %782 = vsyncpa %s781, 1
    %783 = vsyncpa [#allocation13], 1
    %784 = vsyncpa [#allocation16], 1
    %785 = vsyncpa [#allocation8], 1
    %s786 = scalar_lea.sflag [#allocation8], 1
    %787 = vsyncpa %s786, 1

// kernel: tpu_custom_call.1
$region0: #{tpu_custom_call.1}
  #allocation0 [shape = 'u32[]', space=smem, size = 0x4, offset = 0x4, fixed_abs, tag = 'smem constant byte address 0x4 - core index']
  #allocation1 [shape = 'u32[72,128]{1,0:T(1,128)}', space=vmem, size = 0x9000, scoped, tag = 'internal scratch']
  #allocation2 [shape = 'f32[8,32]{1,0:T(8,128)}', space=vmem, size = 0x1000, scoped, tag = 'scratch operand']
  #allocation3 [shape = 'f32[8,1]{1,0:T(8,128)}', space=vmem, size = 0x1000, scoped, tag = 'scratch operand']
  #allocation4 [shape = 'f32[8,1]{1,0:T(8,128)}', space=vmem, size = 0x1000, scoped, tag = 'scratch operand']
  #allocation5 [shape = 'f32[8,32]{1,0:T(8,128)}', space=vmem, size = 0x1000, scoped, tag = 'scratch operand']
  %s0 = inlined_call_operand.hbm [shape: f32[2,8,32], index: 0, kind: input, shape index: {}]
  %s1 = inlined_call_operand.hbm [shape: f32[2,8,32], index: 1, kind: input, shape index: {}]
  %s2 = inlined_call_operand.hbm [shape: f32[32,32], index: 2, kind: input, shape index: {}]
  %s3 = inlined_call_operand.hbm [shape: f32[32,32], index: 3, kind: input, shape index: {}]
  %s4 = inlined_call_operand.hbm [shape: f32[32,32], index: 4, kind: input, shape index: {}]
  %s5 = inlined_call_operand.vmem [shape: f32[1,32], index: 5, kind: input, shape index: {}]
  %s6 = inlined_call_operand.vmem [shape: f32[1,32], index: 6, kind: input, shape index: {}]
  %s7 = inlined_call_operand.vmem [shape: f32[1,32], index: 7, kind: input, shape index: {}]
  %s8 = inlined_call_operand.hbm [shape: f32[32,32], index: 8, kind: input, shape index: {}]
  %s9 = inlined_call_operand.vmem [shape: f32[1,32], index: 9, kind: input, shape index: {}]
  %s10 = inlined_call_operand.hbm [shape: f32[2,8,32], index: 10, kind: output, shape index: {}]
  %s11 = sld [smem:[#allocation0]]
  $region105: #{tpu_custom_call.1} parent=0
    _
  %s13 = ssub.s32 1, %s11
  %s14 = scalar_select 0, %s13, %s11
  $region1: #{tpu_custom_call.1} parent=0
    #allocation6 [shape = 'u8[8192]{0}', space=vmem, size = 0x2000, scoped, tag = 'input window, operand 0']
    #allocation7 [shape = 's32[2]{0}', space=sflag, size = 0x8, scoped, tag = 'scoped memory for tpu_custom_call.1']
    #allocation8 [shape = 's32[2]{0}', space=sflag, size = 0x8, scoped, tag = 'scoped memory for tpu_custom_call.1']
    #allocation9 [shape = 'u8[8192]{0}', space=vmem, size = 0x2000, scoped, tag = 'input window, operand 1']
    #allocation10 [shape = 's32[2]{0}', space=sflag, size = 0x8, scoped, tag = 'scoped memory for tpu_custom_call.1']
    #allocation11 [shape = 'u8[16384]{0}', space=vmem, size = 0x4000, scoped, tag = 'input window, operand 2, single buffered']
    #allocation12 [shape = 'u8[16384]{0}', space=vmem, size = 0x4000, scoped, tag = 'input window, operand 3, single buffered']
    #allocation13 [shape = 's32[1]{0}', space=sflag, size = 0x4, scoped, tag = 'scoped memory for tpu_custom_call.1']
    #allocation14 [shape = 'u8[16384]{0}', space=vmem, size = 0x4000, scoped, tag = 'input window, operand 4, single buffered']
    #allocation15 [shape = 'u8[16384]{0}', space=vmem, size = 0x4000, scoped, tag = 'input window, operand 8, single buffered']
    #allocation16 [shape = 's32[1]{0}', space=sflag, size = 0x4, scoped, tag = 'scoped memory for tpu_custom_call.1']
    #allocation17 [shape = 'u8[8192]{0}', space=vmem, size = 0x2000, scoped, tag = 'output window, operand 0']
    %15 = vsyncpa [#allocation7], 0
    %s16 = scalar_lea.sflag [#allocation7], 1
    %17 = vsyncpa %s16, 0
    %18 = vsyncpa [#allocation10], 0
    %s19 = scalar_lea.sflag [#allocation10], 1
    %20 = vsyncpa %s19, 0
    %21 = vsyncpa [#allocation13], 0
    %22 = vsyncpa [#allocation16], 0
    %23 = vsyncpa [#allocation8], 0
    %s24 = scalar_lea.sflag [#allocation8], 1
    %25 = vsyncpa %s24, 0
    loop: start=0, step=1, limit=4
    $region2: #{tpu_custom_call.1} parent=1 // loop_pre_header
      _
    $region3: #{tpu_custom_call.1} parent=1 // loop_header
      %s27 = sphi 0, %s31
      %p28 = scmp.ge.s32.totalorder %s27, 4
      %s34 = sphi 0, %s53
      %s35 = sphi 0, %s49
      %s36 = sphi 0, %s45
      %s37 = sphi 0, %s34
      %s38 = sphi 0, %s35
      %s39 = sphi 0, %s36
      %s40 = sphi 0, %s37
      %s41 = sphi 0, %s38
      %s42 = sphi 0, %s39
      %s58 = sphi 0, %s60
      %s61 = sphi 0, %s58
      %s62 = sphi 0, %s61
      %s78 = sphi 0, %s62
      %s86 = sphi 0, %s88
      %s89 = sphi 0, %s86
      %s90 = sphi 0, %s89
      %s106 = sphi 0, %s90
      %s110 = sphi 0, %s110
      %s112 = sphi 0, %s110
      %s113 = sphi 0, %s112
      %s127 = sphi 0, %s113
      %s131 = sphi 0, %s131
      %s133 = sphi 0, %s131
      %s134 = sphi 0, %s133
      %s148 = sphi 0, %s134
      %s152 = sphi 0, %s152
      %s154 = sphi 0, %s152
      %s155 = sphi 0, %s154
      %s169 = sphi 0, %s155
      %s173 = sphi 0, %s173
      %s175 = sphi 0, %s173
      %s176 = sphi 0, %s175
      %s190 = sphi 0, %s176
      %s194 = sphi 0, %s194
      %s196 = sphi 0, %s194
      %s197 = sphi 0, %s196
      %s211 = sphi 0, %s197
      %s215 = sphi 0, %s215
      %s217 = sphi 0, %s215
      %s218 = sphi 0, %s217
      %s232 = sphi 0, %s218
      %s236 = sphi 0, %s236
      %s238 = sphi 0, %s236
      %s239 = sphi 0, %s238
      %s253 = sphi 0, %s239
      %s257 = sphi 0, %s257
      %s259 = sphi 0, %s257
      %s260 = sphi 0, %s259
      %s274 = sphi 0, %s260
      %s282 = sphi 0, %s284
      %s285 = sphi 0, %s282
      %s286 = sphi 0, %s285
      %s302 = sphi 0, %s286
    $region4: #{tpu_custom_call.1} parent=1 // loop_header_branch
      %30 = sbr.rel (%p28) target = $region8
    $region5: #{tpu_custom_call.1} parent=1 // loop_body
      %s32 = ssub.s32 %s27, 1
      %s33 = ssub.s32 %s27, 2
      %s43 = sadd.s32 1, %s36
      %p44 = scmp.ge.s32.totalorder %s43, 1
      %s45 = scalar_select %p44, 0, %s43
      %s46 = sadd.s32 1, %s35
      %s47 = scalar_select %p44, %s46, %s35
      %p48 = scmp.ge.s32.totalorder %s47, 1
      %s49 = scalar_select %p48, 0, %s47
      %s50 = sadd.s32 1, %s34
      %s51 = scalar_select %p48, %s50, %s34
      %p52 = scmp.ge.s32.totalorder %s51, 2
      %s53 = scalar_select %p52, 0, %s51
      %s54 = ssub.s32 %s34, %s53
      %s55 = ssub.s32 %s35, %s49
      %s56 = sor.u32 %s54, %s55
      %p57 = scmp.eq.s32.totalorder %s56, 0
      %s59 = sadd.s32 %s58, 1
      %s60 = scalar_select %p57, %s58, %s59
      %p63 = pneg %p57
      %p64 = scmp.eq.s32.totalorder %s27, 1
      %p65 = por %p63, %p64
      %p66 = scmp.ne.s32.totalorder %s58, %s61
      %p67 = scmp.eq.s32.totalorder %s27, 0
      %p68 = por %p66, %p67
      %p69 = scmp.ne.s32.totalorder %s58, %s61
      %p70 = scmp.eq.s32.totalorder %s32, 1
      %p71 = por %p69, %p70
      %p72 = scmp.ne.s32.totalorder %s61, %s62
      %p73 = scmp.eq.s32.totalorder %s32, 0
      %p74 = por %p72, %p73
      %p75 = scmp.ne.s32.totalorder %s61, %s62
      %p76 = scmp.eq.s32.totalorder %s33, 1
      %p77 = por %p75, %p76
      %p79 = scmp.ne.s32.totalorder %s62, %s78
      %p80 = scmp.eq.s32.totalorder %s33, 0
      %p81 = por %p79, %p80
      %s82 = ssub.s32 %s34, %s53
      %s83 = ssub.s32 %s36, %s45
      %s84 = sor.u32 %s82, %s83
      %p85 = scmp.eq.s32.totalorder %s84, 0
      %s87 = sadd.s32 %s86, 1
      %s88 = scalar_select %p85, %s86, %s87
      %p91 = pneg %p85
      %p92 = scmp.eq.s32.totalorder %s27, 1
      %p93 = por %p91, %p92
      %p94 = scmp.ne.s32.totalorder %s86, %s89
      %p95 = scmp.eq.s32.totalorder %s27, 0
      %p96 = por %p94, %p95
      %p97 = scmp.ne.s32.totalorder %s86, %s89
      %p98 = scmp.eq.s32.totalorder %s32, 1
      %p99 = por %p97, %p98
      %p100 = scmp.ne.s32.totalorder %s89, %s90
      %p101 = scmp.eq.s32.totalorder %s32, 0
      %p102 = por %p100, %p101
      %p103 = scmp.ne.s32.totalorder %s89, %s90
      %p104 = scmp.eq.s32.totalorder %s33, 1
      %p105 = por %p103, %p104
      %p107 = scmp.ne.s32.totalorder %s90, %s106
      %p108 = scmp.eq.s32.totalorder %s33, 0
      %p109 = por %p107, %p108
      %s111 = sadd.s32 %s110, 1
      %p114 = scmp.eq.s32.totalorder %s27, 1
      %p115 = scmp.ne.s32.totalorder %s110, %s112
      %p116 = scmp.eq.s32.totalorder %s27, 0
      %p117 = por %p115, %p116
      %p118 = scmp.ne.s32.totalorder %s110, %s112
      %p119 = scmp.eq.s32.totalorder %s32, 1
      %p120 = por %p118, %p119
      %p121 = scmp.ne.s32.totalorder %s112, %s113
      %p122 = scmp.eq.s32.totalorder %s32, 0
      %p123 = por %p121, %p122
      %p124 = scmp.ne.s32.totalorder %s112, %s113
      %p125 = scmp.eq.s32.totalorder %s33, 1
      %p126 = por %p124, %p125
      %p128 = scmp.ne.s32.totalorder %s113, %s127
      %p129 = scmp.eq.s32.totalorder %s33, 0
      %p130 = por %p128, %p129
      %s132 = sadd.s32 %s131, 1
      %p135 = scmp.eq.s32.totalorder %s27, 1
      %p136 = scmp.ne.s32.totalorder %s131, %s133
      %p137 = scmp.eq.s32.totalorder %s27, 0
      %p138 = por %p136, %p137
      %p139 = scmp.ne.s32.totalorder %s131, %s133
      %p140 = scmp.eq.s32.totalorder %s32, 1
      %p141 = por %p139, %p140
      %p142 = scmp.ne.s32.totalorder %s133, %s134
      %p143 = scmp.eq.s32.totalorder %s32, 0
      %p144 = por %p142, %p143
      %p145 = scmp.ne.s32.totalorder %s133, %s134
      %p146 = scmp.eq.s32.totalorder %s33, 1
      %p147 = por %p145, %p146
      %p149 = scmp.ne.s32.totalorder %s134, %s148
      %p150 = scmp.eq.s32.totalorder %s33, 0
      %p151 = por %p149, %p150
      %s153 = sadd.s32 %s152, 1
      %p156 = scmp.eq.s32.totalorder %s27, 1
      %p157 = scmp.ne.s32.totalorder %s152, %s154
      %p158 = scmp.eq.s32.totalorder %s27, 0
      %p159 = por %p157, %p158
      %p160 = scmp.ne.s32.totalorder %s152, %s154
      %p161 = scmp.eq.s32.totalorder %s32, 1
      %p162 = por %p160, %p161
      %p163 = scmp.ne.s32.totalorder %s154, %s155
      %p164 = scmp.eq.s32.totalorder %s32, 0
      %p165 = por %p163, %p164
      %p166 = scmp.ne.s32.totalorder %s154, %s155
      %p167 = scmp.eq.s32.totalorder %s33, 1
      %p168 = por %p166, %p167
      %p170 = scmp.ne.s32.totalorder %s155, %s169
      %p171 = scmp.eq.s32.totalorder %s33, 0
      %p172 = por %p170, %p171
      %s174 = sadd.s32 %s173, 1
      %p177 = scmp.eq.s32.totalorder %s27, 1
      %p178 = scmp.ne.s32.totalorder %s173, %s175
      %p179 = scmp.eq.s32.totalorder %s27, 0
      %p180 = por %p178, %p179
      %p181 = scmp.ne.s32.totalorder %s173, %s175
      %p182 = scmp.eq.s32.totalorder %s32, 1
      %p183 = por %p181, %p182
      %p184 = scmp.ne.s32.totalorder %s175, %s176
      %p185 = scmp.eq.s32.totalorder %s32, 0
      %p186 = por %p184, %p185
      %p187 = scmp.ne.s32.totalorder %s175, %s176
      %p188 = scmp.eq.s32.totalorder %s33, 1
      %p189 = por %p187, %p188
      %p191 = scmp.ne.s32.totalorder %s176, %s190
      %p192 = scmp.eq.s32.totalorder %s33, 0
      %p193 = por %p191, %p192
      %s195 = sadd.s32 %s194, 1
      %p198 = scmp.eq.s32.totalorder %s27, 1
      %p199 = scmp.ne.s32.totalorder %s194, %s196
      %p200 = scmp.eq.s32.totalorder %s27, 0
      %p201 = por %p199, %p200
      %p202 = scmp.ne.s32.totalorder %s194, %s196
      %p203 = scmp.eq.s32.totalorder %s32, 1
      %p204 = por %p202, %p203
      %p205 = scmp.ne.s32.totalorder %s196, %s197
      %p206 = scmp.eq.s32.totalorder %s32, 0
      %p207 = por %p205, %p206
      %p208 = scmp.ne.s32.totalorder %s196, %s197
      %p209 = scmp.eq.s32.totalorder %s33, 1
      %p210 = por %p208, %p209
      %p212 = scmp.ne.s32.totalorder %s197, %s211
      %p213 = scmp.eq.s32.totalorder %s33, 0
      %p214 = por %p212, %p213
      %s216 = sadd.s32 %s215, 1
      %p219 = scmp.eq.s32.totalorder %s27, 1
      %p220 = scmp.ne.s32.totalorder %s215, %s217
      %p221 = scmp.eq.s32.totalorder %s27, 0
      %p222 = por %p220, %p221
      %p223 = scmp.ne.s32.totalorder %s215, %s217
      %p224 = scmp.eq.s32.totalorder %s32, 1
      %p225 = por %p223, %p224
      %p226 = scmp.ne.s32.totalorder %s217, %s218
      %p227 = scmp.eq.s32.totalorder %s32, 0
      %p228 = por %p226, %p227
      %p229 = scmp.ne.s32.totalorder %s217, %s218
      %p230 = scmp.eq.s32.totalorder %s33, 1
      %p231 = por %p229, %p230
      %p233 = scmp.ne.s32.totalorder %s218, %s232
      %p234 = scmp.eq.s32.totalorder %s33, 0
      %p235 = por %p233, %p234
      %s237 = sadd.s32 %s236, 1
      %p240 = scmp.eq.s32.totalorder %s27, 1
      %p241 = scmp.ne.s32.totalorder %s236, %s238
      %p242 = scmp.eq.s32.totalorder %s27, 0
      %p243 = por %p241, %p242
      %p244 = scmp.ne.s32.totalorder %s236, %s238
      %p245 = scmp.eq.s32.totalorder %s32, 1
      %p246 = por %p244, %p245
      %p247 = scmp.ne.s32.totalorder %s238, %s239
      %p248 = scmp.eq.s32.totalorder %s32, 0
      %p249 = por %p247, %p248
      %p250 = scmp.ne.s32.totalorder %s238, %s239
      %p251 = scmp.eq.s32.totalorder %s33, 1
      %p252 = por %p250, %p251
      %p254 = scmp.ne.s32.totalorder %s239, %s253
      %p255 = scmp.eq.s32.totalorder %s33, 0
      %p256 = por %p254, %p255
      %s258 = sadd.s32 %s257, 1
      %p261 = scmp.eq.s32.totalorder %s27, 1
      %p262 = scmp.ne.s32.totalorder %s257, %s259
      %p263 = scmp.eq.s32.totalorder %s27, 0
      %p264 = por %p262, %p263
      %p265 = scmp.ne.s32.totalorder %s257, %s259
      %p266 = scmp.eq.s32.totalorder %s32, 1
      %p267 = por %p265, %p266
      %p268 = scmp.ne.s32.totalorder %s259, %s260
      %p269 = scmp.eq.s32.totalorder %s32, 0
      %p270 = por %p268, %p269
      %p271 = scmp.ne.s32.totalorder %s259, %s260
      %p272 = scmp.eq.s32.totalorder %s33, 1
      %p273 = por %p271, %p272
      %p275 = scmp.ne.s32.totalorder %s260, %s274
      %p276 = scmp.eq.s32.totalorder %s33, 0
      %p277 = por %p275, %p276
      %s278 = ssub.s32 %s34, %s53
      %s279 = ssub.s32 %s35, %s49
      %s280 = sor.u32 %s278, %s279
      %p281 = scmp.eq.s32.totalorder %s280, 0
      %s283 = sadd.s32 %s282, 1
      %s284 = scalar_select %p281, %s282, %s283
      %p287 = pneg %p281
      %p288 = scmp.eq.s32.totalorder %s27, 1
      %p289 = por %p287, %p288
      %p290 = scmp.ne.s32.totalorder %s282, %s285
      %p291 = scmp.eq.s32.totalorder %s27, 0
      %p292 = por %p290, %p291
      %p293 = scmp.ne.s32.totalorder %s282, %s285
      %p294 = scmp.eq.s32.totalorder %s32, 1
      %p295 = por %p293, %p294
      %p296 = scmp.ne.s32.totalorder %s285, %s286
      %p297 = scmp.eq.s32.totalorder %s32, 0
      %p298 = por %p296, %p297
      %p299 = scmp.ne.s32.totalorder %s285, %s286
      %p300 = scmp.eq.s32.totalorder %s33, 1
      %p301 = por %p299, %p300
      %p303 = scmp.ne.s32.totalorder %s286, %s302
      %p304 = scmp.eq.s32.totalorder %s33, 0
      %p305 = por %p303, %p304
      %p306 = scmp.le.s32.totalorder 1, %s27
      %p307 = scmp.lt.s32.totalorder %s27, 3
      %p308 = pnand %p306, %p307
      %p309 = pneg %p308
      // Predicated region
      $region9: #{tpu_custom_call.1} parent=5 // pred_check
        _
      $region10: #{tpu_custom_call.1} parent=5 // pred_check_branch
        %311 = sbr.rel (%p308) target = $region12
      $region11: #{tpu_custom_call.1} parent=5 // pred_region
        %s312 = ssub.s32 %s27, 1
        // Predicated region
        $region13: #{tpu_custom_call.1} parent=11 // pred_check
          %p313 = pneg %p123
        $region14: #{tpu_custom_call.1} parent=11 // pred_check_branch
          %315 = sbr.rel (%p313) target = $region16
        $region15: #{tpu_custom_call.1} parent=11 // pred_region
          %317 = vsyncadd [#allocation10], 0
          %s318 = sshll.u32 %s2, 4
          %s319 = int_to_ptr.hbm [resolvable:$true] %s318
          %s320 = sshll.u32 [#allocation11], 4
          %s321 = int_to_ptr.vmem [resolvable:$true] %s320
          %326 = dma.hbm_to_vmem [thread:$0]  %s319, 512, %s321, [#allocation10], 128, 128, 8
        $region16: #{tpu_custom_call.1} parent=11 // pred_fallthru
          _
        // Predicated region
        $region17: #{tpu_custom_call.1} parent=11 // pred_check
          %p327 = pneg %p144
        $region18: #{tpu_custom_call.1} parent=11 // pred_check_branch
          %329 = sbr.rel (%p327) target = $region20
        $region19: #{tpu_custom_call.1} parent=11 // pred_region
          %331 = vsyncadd [#allocation13], 0
          %s332 = sshll.u32 %s3, 4
          %s333 = int_to_ptr.hbm [resolvable:$true] %s332
          %s334 = sshll.u32 [#allocation12], 4
          %s335 = int_to_ptr.vmem [resolvable:$true] %s334
          %340 = dma.hbm_to_vmem [thread:$0]  %s333, 512, %s335, [#allocation13], 128, 128, 8
        $region20: #{tpu_custom_call.1} parent=11 // pred_fallthru
          _
        // Predicated region
        $region21: #{tpu_custom_call.1} parent=11 // pred_check
          %p341 = pneg %p165
        $region22: #{tpu_custom_call.1} parent=11 // pred_check_branch
          %343 = sbr.rel (%p341) target = $region24
        $region23: #{tpu_custom_call.1} parent=11 // pred_region
          %345 = vsyncadd [#allocation13], 0
          %s346 = sshll.u32 %s4, 4
          %s347 = int_to_ptr.hbm [resolvable:$true] %s346
          %s348 = sshll.u32 [#allocation14], 4
          %s349 = int_to_ptr.vmem [resolvable:$true] %s348
          %354 = dma.hbm_to_vmem [thread:$0]  %s347, 512, %s349, [#allocation13], 128, 128, 8
        $region24: #{tpu_custom_call.1} parent=11 // pred_fallthru
          _
        // Predicated region
        $region25: #{tpu_custom_call.1} parent=11 // pred_check
          %p355 = pneg %p186
        $region26: #{tpu_custom_call.1} parent=11 // pred_check_branch
          %357 = sbr.rel (%p355) target = $region28
        $region27: #{tpu_custom_call.1} parent=11 // pred_region
          _
        $region28: #{tpu_custom_call.1} parent=11 // pred_fallthru
          _
        // Predicated region
        $region29: #{tpu_custom_call.1} parent=11 // pred_check
          %p358 = pneg %p207
        $region30: #{tpu_custom_call.1} parent=11 // pred_check_branch
          %360 = sbr.rel (%p358) target = $region32
        $region31: #{tpu_custom_call.1} parent=11 // pred_region
          _
        $region32: #{tpu_custom_call.1} parent=11 // pred_fallthru
          _
        // Predicated region
        $region33: #{tpu_custom_call.1} parent=11 // pred_check
          %p361 = pneg %p228
        $region34: #{tpu_custom_call.1} parent=11 // pred_check_branch
          %363 = sbr.rel (%p361) target = $region36
        $region35: #{tpu_custom_call.1} parent=11 // pred_region
          _
        $region36: #{tpu_custom_call.1} parent=11 // pred_fallthru
          _
        // Predicated region
        $region37: #{tpu_custom_call.1} parent=11 // pred_check
          %p364 = pneg %p249
        $region38: #{tpu_custom_call.1} parent=11 // pred_check_branch
          %366 = sbr.rel (%p364) target = $region40
        $region39: #{tpu_custom_call.1} parent=11 // pred_region
          %368 = vsyncadd [#allocation16], 0
          %s369 = sshll.u32 %s8, 4
          %s370 = int_to_ptr.hbm [resolvable:$true] %s369
          %s371 = sshll.u32 [#allocation15], 4
          %s372 = int_to_ptr.vmem [resolvable:$true] %s371
          %377 = dma.hbm_to_vmem [thread:$0]  %s370, 512, %s372, [#allocation16], 128, 128, 8
        $region40: #{tpu_custom_call.1} parent=11 // pred_fallthru
          _
        // Predicated region
        $region41: #{tpu_custom_call.1} parent=11 // pred_check
          %p378 = pneg %p270
        $region42: #{tpu_custom_call.1} parent=11 // pred_check_branch
          %380 = sbr.rel (%p378) target = $region44
        $region43: #{tpu_custom_call.1} parent=11 // pred_region
          _
        $region44: #{tpu_custom_call.1} parent=11 // pred_fallthru
          _
      $region12: #{tpu_custom_call.1} parent=5 // pred_fallthru
        _
      %p381 = scmp.lt.s32.totalorder %s27, 2
      // Predicated region
      $region45: #{tpu_custom_call.1} parent=5 // pred_check
        %p382 = pneg %p381
      $region46: #{tpu_custom_call.1} parent=5 // pred_check_branch
        %384 = sbr.rel (%p382) target = $region48
      $region47: #{tpu_custom_call.1} parent=5 // pred_region
        // Predicated region
        $region49: #{tpu_custom_call.1} parent=47 // pred_check
          %p385 = pneg %p68
        $region50: #{tpu_custom_call.1} parent=47 // pred_check_branch
          %387 = sbr.rel (%p385) target = $region52
        $region51: #{tpu_custom_call.1} parent=47 // pred_region
          %s388 = sand.u32 %s58, 1
          %s389 = scalar_lea.sflag [#allocation7], %s388
          %s390 = sand.u32 %s58, 1
          %s391 = smul.addr %s390, 8
          %s392 = scalar_lea.vmem [#allocation6], %s391
          %394 = vsyncadd %s389, 0
          %s395 = sadd.s32 %s35, %s34
          %s396 = smul.addr %s395, 8
          %s397 = scalar_lea.hbm %s0, %s396
          %s399 = sshll.u32 %s397, 4
          %s400 = int_to_ptr.hbm [resolvable:$true] %s399
          %s401 = sshll.u32 %s392, 4
          %s402 = int_to_ptr.vmem [resolvable:$true] %s401
          %404 = dma.hbm_to_vmem [thread:$0]  %s400, 128, %s402, %s389
        $region52: #{tpu_custom_call.1} parent=47 // pred_fallthru
          _
        // Predicated region
        $region53: #{tpu_custom_call.1} parent=47 // pred_check
          %p405 = pneg %p96
        $region54: #{tpu_custom_call.1} parent=47 // pred_check_branch
          %407 = sbr.rel (%p405) target = $region56
        $region55: #{tpu_custom_call.1} parent=47 // pred_region
          %s408 = sand.u32 %s27, 1
          %s409 = scalar_lea.sflag [#allocation10], %s408
          %s410 = sand.u32 %s86, 1
          %s411 = smul.addr %s410, 8
          %s412 = scalar_lea.vmem [#allocation9], %s411
          %414 = vsyncadd %s409, 0
          %s415 = sadd.s32 %s36, %s34
          %s416 = smul.addr %s415, 8
          %s417 = scalar_lea.hbm %s1, %s416
          %s419 = sshll.u32 %s417, 4
          %s420 = int_to_ptr.hbm [resolvable:$true] %s419
          %s421 = sshll.u32 %s412, 4
          %s422 = int_to_ptr.vmem [resolvable:$true] %s421
          %424 = dma.hbm_to_vmem [thread:$0]  %s420, 128, %s422, %s409
        $region56: #{tpu_custom_call.1} parent=47 // pred_fallthru
          _
      $region48: #{tpu_custom_call.1} parent=5 // pred_fallthru
        _
      %p425 = scmp.le.s32.totalorder 1, %s27
      %p426 = scmp.lt.s32.totalorder %s27, 3
      %p427 = pnand %p425, %p426
      %p428 = pneg %p427
      // Predicated region
      $region57: #{tpu_custom_call.1} parent=5 // pred_check
        _
      $region58: #{tpu_custom_call.1} parent=5 // pred_check_branch
        %430 = sbr.rel (%p427) target = $region60
      $region59: #{tpu_custom_call.1} parent=5 // pred_region
        %s431 = ssub.s32 %s27, 1
        %s432 = sand.u32 %s61, 1
        %s433 = scalar_lea.sflag [#allocation7], %s432
        %s434 = sand.u32 %s61, 1
        %s435 = smul.addr %s434, 8
        %s436 = scalar_lea.vmem [#allocation6], %s435
        // Predicated region
        $region61: #{tpu_custom_call.1} parent=59 // pred_check
          %p437 = pneg %p74
        $region62: #{tpu_custom_call.1} parent=59 // pred_check_branch
          %439 = sbr.rel (%p437) target = $region64
        $region63: #{tpu_custom_call.1} parent=59 // pred_region
          %441 = dma.done %s433, 128
        $region64: #{tpu_custom_call.1} parent=59 // pred_fallthru
          _
        %s442 = sand.u32 %s32, 1
        %s443 = scalar_lea.sflag [#allocation10], %s442
        %s444 = sand.u32 %s89, 1
        %s445 = smul.addr %s444, 8
        %s446 = scalar_lea.vmem [#allocation9], %s445
        // Predicated region
        $region65: #{tpu_custom_call.1} parent=59 // pred_check
          %p447 = pneg %p102
        $region66: #{tpu_custom_call.1} parent=59 // pred_check_branch
          %449 = sbr.rel (%p447) target = $region68
        $region67: #{tpu_custom_call.1} parent=59 // pred_region
          %451 = dma.done %s443, 128
        $region68: #{tpu_custom_call.1} parent=59 // pred_fallthru
          _
        // Predicated region
        $region69: #{tpu_custom_call.1} parent=59 // pred_check
          %p452 = pneg %p123
        $region70: #{tpu_custom_call.1} parent=59 // pred_check_branch
          %454 = sbr.rel (%p452) target = $region72
        $region71: #{tpu_custom_call.1} parent=59 // pred_region
          %456 = dma.done [#allocation10], 512
        $region72: #{tpu_custom_call.1} parent=59 // pred_fallthru
          _
        // Predicated region
        $region73: #{tpu_custom_call.1} parent=59 // pred_check
          %p457 = pneg %p144
        $region74: #{tpu_custom_call.1} parent=59 // pred_check_branch
          %459 = sbr.rel (%p457) target = $region76
        $region75: #{tpu_custom_call.1} parent=59 // pred_region
          %461 = dma.done [#allocation13], 512
        $region76: #{tpu_custom_call.1} parent=59 // pred_fallthru
          _
        // Predicated region
        $region77: #{tpu_custom_call.1} parent=59 // pred_check
          %p462 = pneg %p165
        $region78: #{tpu_custom_call.1} parent=59 // pred_check_branch
          %464 = sbr.rel (%p462) target = $region80
        $region79: #{tpu_custom_call.1} parent=59 // pred_region
          %466 = dma.done [#allocation13], 512
        $region80: #{tpu_custom_call.1} parent=59 // pred_fallthru
          _
        // Predicated region
        $region81: #{tpu_custom_call.1} parent=59 // pred_check
          %p467 = pneg %p249
        $region82: #{tpu_custom_call.1} parent=59 // pred_check_branch
          %469 = sbr.rel (%p467) target = $region84
        $region83: #{tpu_custom_call.1} parent=59 // pred_region
          %471 = dma.done [#allocation16], 512
        $region84: #{tpu_custom_call.1} parent=59 // pred_fallthru
          _
        %s472 = sand.u32 %s61, 1
        %s473 = scalar_lea.sflag [#allocation7], %s472
        %s474 = sand.u32 %s61, 1
        %s475 = smul.addr %s474, 8
        %s476 = scalar_lea.vmem [#allocation6], %s475
        %p477 = pneg %p74
        %p478 = pneg %p71
        %s479 = sand.u32 %s32, 1
        %s480 = scalar_lea.sflag [#allocation10], %s479
        %s481 = sand.u32 %s89, 1
        %s482 = smul.addr %s481, 8
        %s483 = scalar_lea.vmem [#allocation9], %s482
        %p484 = pneg %p102
        %p485 = pneg %p99
        %p486 = pneg %p123
        %p487 = pneg %p120
        %p488 = pneg %p144
        %p489 = pneg %p141
        %p490 = pneg %p165
        %p491 = pneg %p162
        %p492 = pneg %p186
        %p493 = pneg %p183
        %p494 = pneg %p207
        %p495 = pneg %p204
        %p496 = pneg %p228
        %p497 = pneg %p225
        %p498 = pneg %p249
        %p499 = pneg %p246
        %p500 = pneg %p270
        %p501 = pneg %p267
        %p502 = pneg %p298
        %p503 = pneg %p295
        %s504 = sand.u32 %s285, 1
        %s505 = scalar_lea.sflag [#allocation8], %s504
        %s506 = sand.u32 %s285, 1
        %s507 = smul.addr %s506, 8
        %s508 = scalar_lea.vmem [#allocation17], %s507
        %p509 = scmp.eq.s32.totalorder %s39, 0
        // Predicated region
        $region85: #{tpu_custom_call.1} parent=59 // pred_check
          %p510 = pneg %p509
        $region86: #{tpu_custom_call.1} parent=59 // pred_check_branch
          %512 = sbr.rel (%p510) target = $region88
        $region87: #{tpu_custom_call.1} parent=59 // pred_region
          %v513 = vld [vmem:[%s436] sm:$0xff]
          %v514 = vld [vmem:[#allocation11] sm:$0xff]
          %v515 = vld [vmem:[#allocation11 + $0x8] sm:$0xff]
          %v516 = vld [vmem:[#allocation11 + $0x10] sm:$0xff]
          %v517 = vld [vmem:[#allocation11 + $0x18] sm:$0xff]
          %v518 = vld [vmem:[%s5] sm:$0x1]
          %v520 = vperm.slane %v518, 0
          %vm522 = vcmask 261120
          %v524 = vsel %vm522, %v513, 0
          %526 = vmatpush.msra.mxu0 0.0
          %527 = vmatpush.msra.mxu0 0.0
          %528 = vmatpush.msra.mxu0 0.0
          %529 = vmatpush.msra.mxu0 0.0
          %530 = vmatpush.msra.mxu0 0.0
          %531 = vmatpush.msra.mxu0 0.0
          %532 = vmatpush.msra.mxu0 0.0
          %533 = vmatpush.msra.mxu0 0.0
          %534 = vmatpush.msra.mxu0 0.0
          %535 = vmatpush.msra.mxu0 0.0
          %536 = vmatpush.msra.mxu0 0.0
          %537 = vmatpush.msra.mxu0 0.0
          %538 = vmatpush.msra.mxu0 %v517
          %539 = vmatpush.msra.mxu0 %v516
          %540 = vmatpush.msra.mxu0 %v515
          %541 = vmatpush.msra.mxu0 %v514
          %542 = vmatmul.f32.gmra.mxu0 %v524
          %v543 = vpop.f32.mrf.mxu0
          %v544 = vadd.f32 %v520, %v543
          %545 = vdwg.mxu0
          %v546 = vmul.f32 %v544, 0.17677669
          %547 = vst.msk [vmem:[#allocation2] sm:$0xff] %vm522, %v546
          %vm548 = vcmask 7168
          %549 = vst.msk [vmem:[#allocation3] sm:$0xff] %vm548, -inf
          %550 = vst.msk [vmem:[#allocation4] sm:$0xff] %vm548, 0.0
          %551 = vst.msk [vmem:[#allocation5] sm:$0xff] %vm522, 0.0
        $region88: #{tpu_custom_call.1} parent=59 // pred_fallthru
          _
        %v552 = vld [vmem:[%s446] sm:$0xff]
        %v553 = vld [vmem:[#allocation12] sm:$0xff]
        %v554 = vld [vmem:[#allocation12 + $0x8] sm:$0xff]
        %v555 = vld [vmem:[#allocation12 + $0x10] sm:$0xff]
        %v556 = vld [vmem:[#allocation12 + $0x18] sm:$0xff]
        %v557 = vld [vmem:[%s6] sm:$0x1]
        %v559 = vperm.slane %v557, 0
        %vm561 = vcmask 261120
        %v563 = vsel %vm561, %v552, 0
        %565 = vmatpush.msra.mxu0 0.0
        %566 = vmatpush.msra.mxu0 0.0
        %567 = vmatpush.msra.mxu0 0.0
        %568 = vmatpush.msra.mxu0 0.0
        %569 = vmatpush.msra.mxu0 0.0
        %570 = vmatpush.msra.mxu0 0.0
        %571 = vmatpush.msra.mxu0 0.0
        %572 = vmatpush.msra.mxu0 0.0
        %573 = vmatpush.msra.mxu0 0.0
        %574 = vmatpush.msra.mxu0 0.0
        %575 = vmatpush.msra.mxu0 0.0
        %576 = vmatpush.msra.mxu0 0.0
        %577 = vmatpush.msra.mxu0 %v556
        %578 = vmatpush.msra.mxu0 %v555
        %579 = vmatpush.msra.mxu0 %v554
        %580 = vmatpush.msra.mxu0 %v553
        %581 = vmatmul.f32.gmra.mxu0 %v563
        %v582 = vpop.f32.mrf.mxu0
        %v583 = vadd.f32 %v559, %v582
        %584 = vdwg.mxu0
        %v585 = vld [vmem:[#allocation14] sm:$0xff]
        %v586 = vld [vmem:[#allocation14 + $0x8] sm:$0xff]
        %v587 = vld [vmem:[#allocation14 + $0x10] sm:$0xff]
        %v588 = vld [vmem:[#allocation14 + $0x18] sm:$0xff]
        %v589 = vld [vmem:[%s7] sm:$0x1]
        %v591 = vperm.slane %v589, 0
        %593 = vmatpush.msra.mxu0 0.0
        %594 = vmatpush.msra.mxu0 0.0
        %595 = vmatpush.msra.mxu0 0.0
        %596 = vmatpush.msra.mxu0 0.0
        %597 = vmatpush.msra.mxu0 0.0
        %598 = vmatpush.msra.mxu0 0.0
        %599 = vmatpush.msra.mxu0 0.0
        %600 = vmatpush.msra.mxu0 0.0
        %601 = vmatpush.msra.mxu0 0.0
        %602 = vmatpush.msra.mxu0 0.0
        %603 = vmatpush.msra.mxu0 0.0
        %604 = vmatpush.msra.mxu0 0.0
        %605 = vmatpush.msra.mxu0 %v588
        %606 = vmatpush.msra.mxu0 %v587
        %607 = vmatpush.msra.mxu0 %v586
        %608 = vmatpush.msra.mxu0 %v585
        %609 = vmatmul.f32.gmra.mxu0 %v563
        %v610 = vpop.f32.mrf.mxu0
        %v611 = vadd.f32 %v591, %v610
        %612 = vdwg.mxu0
        %v613 = vld [vmem:[#allocation2] sm:$0xff]
        %v615 = vsel %vm561, %v613, 0
        %v618 = vsel %vm561, %v583, 0
        %620 = vmatpush.xpose.msra.mxu0 0.0
        %621 = vmatpush.xpose.msra.mxu0 0.0
        %622 = vmatpush.xpose.msra.mxu0 0.0
        %623 = vmatpush.xpose.msra.mxu0 0.0
        %624 = vmatpush.xpose.msra.mxu0 0.0
        %625 = vmatpush.xpose.msra.mxu0 0.0
        %626 = vmatpush.xpose.msra.mxu0 0.0
        %627 = vmatpush.xpose.msra.mxu0 0.0
        %628 = vmatpush.xpose.msra.mxu0 0.0
        %629 = vmatpush.xpose.msra.mxu0 0.0
        %630 = vmatpush.xpose.msra.mxu0 0.0
        %631 = vmatpush.xpose.msra.mxu0 0.0
        %632 = vmatpush.xpose.msra.mxu0 0.0
        %633 = vmatpush.xpose.msra.mxu0 0.0
        %634 = vmatpush.xpose.msra.mxu0 0.0
        %635 = vmatpush.xpose.msra.mxu0 %v618
        %636 = vmatmul.f32.gmra.mxu0 %v615
        %v637 = vpop.f32.mrf.mxu0
        %v638 = vadd.f32 0.0, %v637
        %639 = vdwg.mxu0
        %v640 = vld [vmem:[#allocation3] sm:$0xff]
        %vm641 = vcmask 64512
        %v642 = vsel %vm641, %v638, -inf
        %643 = vmax.xlane.f32.xlu0 %v642
        %v644 = vpop.xlane.xlu0 %643
        %v645 = vmax.f32 %v640, %v644
        %v646 = vsub.f32 %v640, %v645
        %v647 = vmul.f32 %v646, 1.442695
        %v648 = vpow.pop %v647
        %650 = vset.pattern.permute.xlu0 0
        %651 = vperm.xlu0 %650, %v645
        %v652 = vpop.permute.xlu0 %651
        %v654 = vsub.f32 %v638, %v652
        %v655 = vmul.f32 %v654, 1.442695
        %v656 = vpow.pop %v655
        %v657 = vld [vmem:[#allocation4] sm:$0xff]
        %v658 = vmul.f32 %v648, %v657
        %v659 = vsel %vm641, %v656, 0.0
        %660 = vadd.xlane.f32.xlu0 %v659
        %v661 = vpop.xlane.xlu0 %660
        %v662 = vadd.f32 %v658, %v661
        %vm663 = vcmask 7168
        %664 = vst.msk [vmem:[#allocation4] sm:$0xff] %vm663, %v662
        %v665 = vld [vmem:[#allocation5] sm:$0xff]
        %667 = vset.pattern.permute.xlu0 0
        %668 = vperm.xlu0 %667, %v648
        %v669 = vpop.permute.xlu0 %668
        %v671 = vmul.f32 %v669, %v665
        %v673 = vsel %vm641, %v656, 0
        %675 = vmatpush.msra.mxu0 0.0
        %676 = vmatpush.msra.mxu0 0.0
        %677 = vmatpush.msra.mxu0 0.0
        %678 = vmatpush.msra.mxu0 0.0
        %679 = vmatpush.msra.mxu0 0.0
        %680 = vmatpush.msra.mxu0 0.0
        %681 = vmatpush.msra.mxu0 0.0
        %682 = vmatpush.msra.mxu0 0.0
        %683 = vmatpush.msra.mxu0 0.0
        %684 = vmatpush.msra.mxu0 0.0
        %685 = vmatpush.msra.mxu0 0.0
        %686 = vmatpush.msra.mxu0 0.0
        %687 = vmatpush.msra.mxu0 0.0
        %688 = vmatpush.msra.mxu0 0.0
        %689 = vmatpush.msra.mxu0 0.0
        %690 = vmatpush.msra.mxu0 %v611
        %691 = vmatmul.f32.gmra.mxu0 %v673
        %v692 = vpop.f32.mrf.mxu0
        %v693 = vadd.f32 0.0, %v692
        %694 = vdwg.mxu0
        %v695 = vadd.f32 %v671, %v693
        %696 = vst.msk [vmem:[#allocation5] sm:$0xff] %vm561, %v695
        %697 = vst.msk [vmem:[#allocation3] sm:$0xff] %vm663, %v645
        // Predicated region
        $region89: #{tpu_custom_call.1} parent=59 // pred_check
          %p698 = pneg %p509
        $region90: #{tpu_custom_call.1} parent=59 // pred_check_branch
          %700 = sbr.rel (%p698) target = $region92
        $region91: #{tpu_custom_call.1} parent=59 // pred_region
          %v701 = vld [vmem:[#allocation4] sm:$0xff]
          %v702 = vrcp.pop %v701
          %v703 = vld [vmem:[#allocation5] sm:$0xff]
          %705 = vset.pattern.permute.xlu0 0
          %706 = vperm.xlu0 %705, %v702
          %v707 = vpop.permute.xlu0 %706
          %v709 = vmul.f32 %v703, %v707
          %v710 = vld [vmem:[#allocation15] sm:$0xff]
          %v711 = vld [vmem:[#allocation15 + $0x8] sm:$0xff]
          %v712 = vld [vmem:[#allocation15 + $0x10] sm:$0xff]
          %v713 = vld [vmem:[#allocation15 + $0x18] sm:$0xff]
          %v714 = vld [vmem:[%s9] sm:$0x1]
          %v716 = vperm.slane %v714, 0
          %v719 = vsel %vm561, %v709, 0
          %721 = vmatpush.msra.mxu0 0.0
          %722 = vmatpush.msra.mxu0 0.0
          %723 = vmatpush.msra.mxu0 0.0
          %724 = vmatpush.msra.mxu0 0.0
          %725 = vmatpush.msra.mxu0 0.0
          %726 = vmatpush.msra.mxu0 0.0
          %727 = vmatpush.msra.mxu0 0.0
          %728 = vmatpush.msra.mxu0 0.0
          %729 = vmatpush.msra.mxu0 0.0
          %730 = vmatpush.msra.mxu0 0.0
          %731 = vmatpush.msra.mxu0 0.0
          %732 = vmatpush.msra.mxu0 0.0
          %733 = vmatpush.msra.mxu0 %v713
          %734 = vmatpush.msra.mxu0 %v712
          %735 = vmatpush.msra.mxu0 %v711
          %736 = vmatpush.msra.mxu0 %v710
          %737 = vmatmul.f32.gmra.mxu0 %v719
          %v738 = vpop.f32.mrf.mxu0
          %v739 = vadd.f32 %v716, %v738
          %740 = vdwg.mxu0
          %741 = vst.msk [vmem:[%s508] sm:$0xff] %vm561, %v739
        $region92: #{tpu_custom_call.1} parent=59 // pred_fallthru
          _
        %s742 = sand.u32 %s285, 1
        %s743 = scalar_lea.sflag [#allocation8], %s742
        %s744 = sand.u32 %s285, 1
        %s745 = smul.addr %s744, 8
        %s746 = scalar_lea.vmem [#allocation17], %s745
        // Predicated region
        $region93: #{tpu_custom_call.1} parent=59 // pred_check
          %p747 = pneg %p295
        $region94: #{tpu_custom_call.1} parent=59 // pred_check_branch
          %749 = sbr.rel (%p747) target = $region96
        $region95: #{tpu_custom_call.1} parent=59 // pred_region
          %751 = vsyncadd %s743, 0
          %s752 = sadd.s32 %s38, %s37
          %s753 = smul.addr %s752, 8
          %s754 = scalar_lea.hbm %s10, %s753
          %s756 = sshll.u32 %s746, 4
          %s757 = int_to_ptr.vmem [resolvable:$true] %s756
          %s758 = sshll.u32 %s754, 4
          %s759 = int_to_ptr.hbm [resolvable:$true] %s758
          %761 = dma.vmem_to_hbm [thread:$0]  %s757, 128, %s759, %s743
        $region96: #{tpu_custom_call.1} parent=59 // pred_fallthru
          _
      $region60: #{tpu_custom_call.1} parent=5 // pred_fallthru
        _
      %p762 = scmp.le.s32.totalorder 2, %s27
      // Predicated region
      $region97: #{tpu_custom_call.1} parent=5 // pred_check
        %p763 = pneg %p762
      $region98: #{tpu_custom_call.1} parent=5 // pred_check_branch
        %765 = sbr.rel (%p763) target = $region100
      $region99: #{tpu_custom_call.1} parent=5 // pred_region
        %s766 = ssub.s32 %s27, 2
        // Predicated region
        $region101: #{tpu_custom_call.1} parent=99 // pred_check
          %p767 = pneg %p301
        $region102: #{tpu_custom_call.1} parent=99 // pred_check_branch
          %769 = sbr.rel (%p767) target = $region104
        $region103: #{tpu_custom_call.1} parent=99 // pred_region
          %s770 = sand.u32 %s286, 1
          %s771 = scalar_lea.sflag [#allocation8], %s770
          %s772 = sand.u32 %s286, 1
          %s773 = smul.addr %s772, 8
          %s774 = scalar_lea.vmem [#allocation17], %s773
          %776 = dma.done %s771, 128
        $region104: #{tpu_custom_call.1} parent=99 // pred_fallthru
          _
      $region100: #{tpu_custom_call.1} parent=5 // pred_fallthru
        _
    $region6: #{tpu_custom_call.1} parent=1 // loop_footer
      %s31 = sadd.s32 1, %s27
    $region7: #{tpu_custom_call.1} parent=1 // loop_footer_branch
      %26 = sbr.rel target = $region3
    $region8: #{tpu_custom_call.1} parent=1 // loop_exit
      _
    %777 = vsyncpa [#allocation7], 1
    %s778 = scalar_lea.sflag [#allocation7], 1
    %779 = vsyncpa %s778, 1
    %780 = vsyncpa [#allocation10], 1
    %s781 = scalar_lea.sflag [#allocation10], 1
    %782 = vsyncpa %s781, 1
    %783 = vsyncpa [#allocation13], 1
    %784 = vsyncpa [#allocation16], 1
    %785 = vsyncpa [#allocation8], 1
    %s786 = scalar_lea.sflag [#allocation8], 1
    %787 = vsyncpa %s786, 1

</llo_original>
